<compile_context>
chip_gen: v7x
topology: tpu7x:2x2x1
jax: 0.10.0
libtpu: 0.0.40
codegen_flags: <defaults>
</compile_context>

<pallas_src>
import numpy as np

import jax
import jax.numpy as jnp
from jax import lax
from jax.experimental import pallas as pl
from jax.experimental.pallas import tpu as pltpu

_BN_EPS = 1e-5


# ---------------------------------------------------------------------------
# Static 1-D bilinear interpolation operator (rows = output, cols = input).
# align_corners=False (half-pixel) — the modern F.upsample/F.interpolate default.
# ---------------------------------------------------------------------------
def _bilinear_matrix(out_size, in_size, align_corners=False):
    if out_size == in_size:
        return np.eye(out_size, dtype=np.float32)
    if align_corners:   # legacy PyTorch (<0.4) default, kept for reference
        s = np.arange(out_size, dtype=np.float64) * (in_size - 1) / max(out_size - 1, 1)
    else:
        s = (np.arange(out_size, dtype=np.float64) + 0.5) * (in_size / out_size) - 0.5
        s = np.clip(s, 0.0, in_size - 1)
    p0 = np.floor(s).astype(np.int64)
    p1 = np.minimum(p0 + 1, in_size - 1)
    w1 = (s - p0).astype(np.float32)
    m = np.zeros((out_size, in_size), np.float32)
    m[np.arange(out_size), p0] += 1.0 - w1
    m[np.arange(out_size), p1] += w1
    return m


# ---------------------------------------------------------------------------
# Fused kernel: the entire grid-attention forward for one batch element.
# ---------------------------------------------------------------------------
def _fused_grid_attention_kernel(g2_ref, xsd_ref, x2t_ref,
                                 wphi_ref, bphi_ref, uphi_ref,
                                 wth_ref, psiw_ref, psib_ref,
                                 uatt_ref, wf_ref, shift_ref,
                                 o_ref, sig_ref):
    f32 = jnp.float32

    # phi(g): 1x1 conv + bias, bilinear-resized to the theta grid via a small matmul.
    phi_c = jnp.dot(g2_ref[0], wphi_ref[...], preferred_element_type=f32) + bphi_ref[...]
    phi_up = jnp.dot(uphi_ref[...], phi_c, preferred_element_type=f32)            # (Mc, Ci)

    # theta(x): 2x2 / stride-2 conv as a space-to-depth GEMM (bf16 in, f32 acc).
    theta = jnp.dot(xsd_ref[0], wth_ref[...], preferred_element_type=f32)         # (Mc, Ci)

    # relu -> psi (1x1 conv, Cout=1) as a lane reduction -> sigmoid  (coarse attention).
    act = jnp.maximum(theta + phi_up, 0.0)
    att_c = jax.nn.sigmoid(
        jnp.sum(act * psiw_ref[...], axis=-1, keepdims=True) + psib_ref[...])     # (Mc, 1)

    # Bilinear upsample of the attention map to the fine grid, kept lane-dense (1, Mf):
    # exact f32 on VPU + sublane reduce (no MXU / no bf16 quantisation after the sigmoid).
    att_row = jnp.sum(uatt_ref[...] * att_c, axis=0, keepdims=True)               # (1, Mf)

    # W 1x1 conv (eval-mode BN folded into weight/shift); gate AFTER the GEMM:
    #   (diag(att)·x)·W == diag(att)·(x·W)
    wy = jnp.dot(wf_ref[...], x2t_ref[0], preferred_element_type=f32)             # (Cin, Mf)
    o_ref[0] = wy * att_row + shift_ref[...]
    sig_ref[0] = att_row


# ---------------------------------------------------------------------------
# _GridAttentionBlockND forward (dimension=2, mode='concatenation')
# ---------------------------------------------------------------------------
def grid_attention_block_2d(p, x, g):
    """x: (B, Cin, H, W), g: (B, Cg, Hg, Wg) -> (W_y (B,Cin,H,W), sigm (B,1,H,W))."""
    B, Cin, H, W = x.shape
    _, Cg, Hg, Wg = g.shape
    Ci = p["theta"]["w"].shape[0]
    Ht, Wt = H // 2, W // 2                     # theta: k=2, s=2, no padding
    Mc, Mf, Mg = Ht * Wt, H * W, Hg * Wg

    x = x.astype(jnp.float32)
    g = g.astype(jnp.float32)

    # ---- layout prep (cheap one-time XLA ops, no pallas intermediates) ----------------
    # theta input: space-to-depth, rows = coarse pixels (h*Wt+w), cols = (c, kh, kw)
    x_sd = x[:, :, : 2 * Ht, : 2 * Wt].reshape(B, Cin, Ht, 2, Wt, 2)
    x_sd = x_sd.transpose(0, 2, 4, 1, 3, 5).reshape(B, Mc, 4 * Cin).astype(jnp.bfloat16)
    # W-conv input: channels-in-sublanes — a pure reshape of the NCHW input (no transpose).
    x2t = x.reshape(B, Cin, Mf).astype(jnp.bfloat16)
    # gating signal: rows = gating pixels, cols = gating channels
    g2 = g.transpose(0, 2, 3, 1).reshape(B, Mg, Cg)

    # ---- weights (BN folded) and static interpolation operators -----------------------
    w_theta = p["theta"]["w"].reshape(Ci, 4 * Cin).T.astype(jnp.bfloat16)          # (4Cin, Ci)
    w_phi = p["phi"]["w"][:, :, 0, 0].T.astype(jnp.float32)                        # (Cg, Ci)
    b_phi = p["phi"]["b"].reshape(1, Ci).astype(jnp.float32)
    psi_w = p["psi"]["w"][:, :, 0, 0].reshape(1, Ci).astype(jnp.float32)
    psi_b = jnp.asarray(p["psi"]["b"], jnp.float32).reshape(1, 1)

    scale = p["W_bn"]["gamma"] / jnp.sqrt(p["W_bn"]["var"] + _BN_EPS)
    shift = (p["W_bn"]["beta"] - p["W_bn"]["mean"] * scale
             + p["W_conv"]["b"] * scale).reshape(Cin, 1).astype(jnp.float32)
    w_fold = (p["W_conv"]["w"][:, :, 0, 0] * scale[:, None]).astype(jnp.bfloat16)  # (Cin, Cin)

    # bilinear operators (align_corners=False), built once at trace time (static shapes)
    u_phi = jnp.asarray(np.kron(_bilinear_matrix(Ht, Hg), _bilinear_matrix(Wt, Wg)))      # (Mc, Mg)
    u_att_t = jnp.asarray(np.kron(_bilinear_matrix(H, Ht), _bilinear_matrix(W, Wt)).T)    # (Mc, Mf)
    # TODO(synk): the dense (Mc, Mf) upsample operator is O((H*W)^2/4); for large spatial
    #             resolutions replace it with a separable / row-tiled scheme.

    batch_spec = lambda shape: pl.BlockSpec((1,) + shape, lambda b: (b, 0, 0))
    const_spec = lambda shape: pl.BlockSpec(shape, lambda b: (0, 0))

    o, sig = pl.pallas_call(
        _fused_grid_attention_kernel,
        out_shape=(jax.ShapeDtypeStruct((B, Cin, Mf), jnp.float32),
                   jax.ShapeDtypeStruct((B, 1, Mf), jnp.float32)),
        grid=(B,),
        in_specs=[
            batch_spec((Mg, Cg)),        # g2
            batch_spec((Mc, 4 * Cin)),   # x_sd
            batch_spec((Cin, Mf)),       # x2t
            const_spec((Cg, Ci)),        # w_phi
            const_spec((1, Ci)),         # b_phi
            const_spec((Mc, Mg)),        # u_phi
            const_spec((4 * Cin, Ci)),   # w_theta
            const_spec((1, Ci)),         # psi_w
            const_spec((1, 1)),          # psi_b
            const_spec((Mc, Mf)),        # u_att_t
            const_spec((Cin, Cin)),      # w_fold
            const_spec((Cin, 1)),        # shift
        ],
        out_specs=(batch_spec((Cin, Mf)), batch_spec((1, Mf))),
        compiler_params=pltpu.CompilerParams(dimension_semantics=("parallel",)),
    )(g2, x_sd, x2t, w_phi, b_phi, u_phi, w_theta, psi_w, psi_b, u_att_t, w_fold, shift)

    # both outputs are already in NCHW element order — pure reshapes, no transposes
    return o.reshape(B, Cin, H, W), sig.reshape(B, 1, H, W)


# ---------------------------------------------------------------------------
# Pure-JAX f32 reference (same interpolation convention) for a sanity check.
# ---------------------------------------------------------------------------
def reference_forward(p, x, g):
    B, Cin, H, W = x.shape
    _, Cg, Hg, Wg = g.shape
    Ht, Wt = H // 2, W // 2
    dn = ("NCHW", "OIHW", "NCHW")
    theta = lax.conv_general_dilated(x, p["theta"]["w"], (2, 2), "VALID", dimension_numbers=dn)
    phi = lax.conv_general_dilated(g, p["phi"]["w"], (1, 1), "VALID", dimension_numbers=dn)
    phi = phi + p["phi"]["b"][None, :, None, None]
    uh, uw = jnp.asarray(_bilinear_matrix(Ht, Hg)), jnp.asarray(_bilinear_matrix(Wt, Wg))
    phi_up = jnp.einsum("hp,bcpq,wq->bchw", uh, phi, uw)
    f = jnp.maximum(theta + phi_up, 0.0)
    logit = jnp.einsum("bchw,c->bhw", f, p["psi"]["w"][0, :, 0, 0]) + p["psi"]["b"][0]
    att = jax.nn.sigmoid(logit)[:, None]
    uh2, uw2 = jnp.asarray(_bilinear_matrix(H, Ht)), jnp.asarray(_bilinear_matrix(W, Wt))
    att_up = jnp.einsum("hp,bcpq,wq->bchw", uh2, att, uw2)
    y = att_up * x
    wy = lax.conv_general_dilated(y, p["W_conv"]["w"], (1, 1), "VALID", dimension_numbers=dn)
    wy = wy + p["W_conv"]["b"][None, :, None, None]
    scale = p["W_bn"]["gamma"] / jnp.sqrt(p["W_bn"]["var"] + _BN_EPS)
    wy = wy * scale[None, :, None, None] \
        + (p["W_bn"]["beta"] - p["W_bn"]["mean"] * scale)[None, :, None, None]
    return wy, att_up


# ---------------------------------------------------------------------------
# Deterministic synthetic parameters (kaiming-style)
# ---------------------------------------------------------------------------
def build_params(key, in_channels, gating_channels, inter_channels):
    ks = jax.random.split(key, 8)

    def kaiming(k, shape):
        fan_in = shape[1] * shape[2] * shape[3]
        return jax.random.normal(k, shape, jnp.float32) * jnp.sqrt(2.0 / fan_in)

    Ci = inter_channels
    return {
        "theta": {"w": kaiming(ks[0], (Ci, in_channels, 2, 2))},                 # bias=False
        "phi": {"w": kaiming(ks[1], (Ci, gating_channels, 1, 1)),
                "b": 0.1 * jax.random.normal(ks[2], (Ci,), jnp.float32)},
        "psi": {"w": kaiming(ks[3], (1, Ci, 1, 1)),
                "b": 0.1 * jax.random.normal(ks[4], (1,), jnp.float32)},
        "W_conv": {"w": kaiming(ks[5], (in_channels, in_channels, 1, 1)),
                   "b": 0.1 * jax.random.normal(ks[6], (in_channels,), jnp.float32)},
        "W_bn": {"gamma": 1.0 + 0.02 * jax.random.normal(ks[7], (in_channels,), jnp.float32),
                 "beta": jnp.zeros((in_channels,), jnp.float32),
                 "mean": jnp.zeros((in_channels,), jnp.float32),
                 "var": jnp.ones((in_channels,), jnp.float32)},
    }


# ---------------------------------------------------------------------------
if __name__ == "__main__":
    in_channels = 32
    gating_channels = 64
    inter_channels = in_channels // 2      # module default (inter_channels=None)
    B, H, W = 2, 16, 16
    Hg, Wg = 4, 4                          # typical gating signal from a deeper layer

    key = jax.random.PRNGKey(0)
    kx, kg, kp = jax.random.split(key, 3)
    x = jax.random.normal(kx, (B, in_channels, H, W), jnp.float32)
    g = jax.random.normal(kg, (B, gating_channels, Hg, Wg), jnp.float32)
    params = build_params(kp, in_channels, gating_channels, inter_channels)

    fwd = jax.jit(grid_attention_block_2d)
    w_y, sigm = jax.block_until_ready(fwd(params, x, g))

    assert w_y.shape == (B, in_channels, H, W), w_y.shape
    assert sigm.shape == (B, 1, H, W), sigm.shape
    assert bool(jnp.all(jnp.isfinite(w_y))) and bool(jnp.all(jnp.isfinite(sigm)))
    assert bool(jnp.all(sigm >= -1e-5)) and bool(jnp.all(sigm <= 1.0 + 1e-5))

    # sanity check against a pure-JAX f32 reference (loose tolerance for bf16 MXU inputs)
    w_y_ref, sigm_ref = jax.jit(reference_forward)(params, x, g)
    np.testing.assert_allclose(np.asarray(sigm), np.asarray(sigm_ref), atol=8e-2, rtol=0)
    np.testing.assert_allclose(np.asarray(w_y), np.asarray(w_y_ref), atol=2e-1, rtol=0)

    print("KERNEL_OK")
</pallas_src>

<mosaic_0001>
module attributes {stable_mosaic.version = 11 : i64} {
  func.func @_fused_grid_attention_kernel(%arg0: i32, %arg1: memref<1x16x64xf32, #tpu.memory_space<vmem>>, %arg2: memref<1x64x128xbf16, #tpu.memory_space<vmem>>, %arg3: memref<1x32x256xbf16, #tpu.memory_space<vmem>>, %arg4: memref<64x16xf32, #tpu.memory_space<vmem>>, %arg5: memref<1x16xf32, #tpu.memory_space<vmem>>, %arg6: memref<64x16xf32, #tpu.memory_space<vmem>>, %arg7: memref<128x16xbf16, #tpu.memory_space<vmem>>, %arg8: memref<1x16xf32, #tpu.memory_space<vmem>>, %arg9: memref<1x1xf32, #tpu.memory_space<vmem>>, %arg10: memref<64x256xf32, #tpu.memory_space<vmem>>, %arg11: memref<32x32xbf16, #tpu.memory_space<vmem>>, %arg12: memref<32x1xf32, #tpu.memory_space<vmem>>, %arg13: memref<1x32x256xf32, #tpu.memory_space<vmem>>, %arg14: memref<1x1x256xf32, #tpu.memory_space<vmem>>) attributes {dimension_semantics = [#tpu.dimension_semantics<parallel>], iteration_bounds = array<i64: 2>, scalar_prefetch = 0 : i64, scratch_operands = 0 : i64, tpu.core_type = #tpu.core_type<tc>, window_params = [{transform_indices = @transform_0, window_bounds = array<i64: 1, 16, 64>}, {transform_indices = @transform_1, window_bounds = array<i64: 1, 64, 128>}, {transform_indices = @transform_2, window_bounds = array<i64: 1, 32, 256>}, {pipeline_mode = #tpu.pipeline_mode<synchronous>, transform_indices = @transform_3, window_bounds = array<i64: 64, 16>}, {pipeline_mode = #tpu.pipeline_mode<synchronous>, transform_indices = @transform_4, window_bounds = array<i64: 1, 16>}, {pipeline_mode = #tpu.pipeline_mode<synchronous>, transform_indices = @transform_5, window_bounds = array<i64: 64, 16>}, {pipeline_mode = #tpu.pipeline_mode<synchronous>, transform_indices = @transform_6, window_bounds = array<i64: 128, 16>}, {pipeline_mode = #tpu.pipeline_mode<synchronous>, transform_indices = @transform_7, window_bounds = array<i64: 1, 16>}, {pipeline_mode = #tpu.pipeline_mode<synchronous>, transform_indices = @transform_8, window_bounds = array<i64: 1, 1>}, {pipeline_mode = #tpu.pipeline_mode<synchronous>, transform_indices = @transform_9, window_bounds = array<i64: 64, 256>}, {pipeline_mode = #tpu.pipeline_mode<synchronous>, transform_indices = @transform_10, window_bounds = array<i64: 32, 32>}, {pipeline_mode = #tpu.pipeline_mode<synchronous>, transform_indices = @transform_11, window_bounds = array<i64: 32, 1>}, {transform_indices = @transform_12, window_bounds = array<i64: 1, 32, 256>}, {transform_indices = @transform_13, window_bounds = array<i64: 1, 1, 256>}]} {
    %c0 = arith.constant 0 : index
    %c0_0 = arith.constant 0 : index
    %c0_1 = arith.constant 0 : index
    %0 = vector.load %arg1[%c0, %c0_0, %c0_1] : memref<1x16x64xf32, #tpu.memory_space<vmem>>, vector<1x16x64xf32>
    %1 = vector.shape_cast %0 : vector<1x16x64xf32> to vector<16x64xf32>
    %c0_2 = arith.constant 0 : index
    %c0_3 = arith.constant 0 : index
    %2 = vector.load %arg4[%c0_2, %c0_3] : memref<64x16xf32, #tpu.memory_space<vmem>>, vector<64x16xf32>
    %cst = arith.constant dense<0.000000e+00> : vector<16x16xf32>
    %3 = tpu.matmul %1, %2, %cst {dimension_numbers = #tpu.dot_dimension_numbers<[1], [0], [0], [1], [0, 0, 1, 1], [], []>} : vector<16x64xf32>, vector<64x16xf32>, vector<16x16xf32> -> vector<16x16xf32>
    %c0_4 = arith.constant 0 : index
    %c0_5 = arith.constant 0 : index
    %4 = vector.load %arg5[%c0_4, %c0_5] : memref<1x16xf32, #tpu.memory_space<vmem>>, vector<1x16xf32>
    %5 = vector.broadcast %4 : vector<1x16xf32> to vector<16x16xf32>
    %6 = arith.addf %3, %5 : vector<16x16xf32>
    %c0_6 = arith.constant 0 : index
    %c0_7 = arith.constant 0 : index
    %7 = vector.load %arg6[%c0_6, %c0_7] : memref<64x16xf32, #tpu.memory_space<vmem>>, vector<64x16xf32>
    %cst_8 = arith.constant dense<0.000000e+00> : vector<64x16xf32>
    %8 = tpu.matmul %7, %6, %cst_8 {dimension_numbers = #tpu.dot_dimension_numbers<[1], [0], [0], [1], [0, 0, 1, 1], [], []>} : vector<64x16xf32>, vector<16x16xf32>, vector<64x16xf32> -> vector<64x16xf32>
    %c0_9 = arith.constant 0 : index
    %c0_10 = arith.constant 0 : index
    %c0_11 = arith.constant 0 : index
    %9 = vector.load %arg2[%c0_9, %c0_10, %c0_11] : memref<1x64x128xbf16, #tpu.memory_space<vmem>>, vector<1x64x128xbf16>
    %10 = vector.shape_cast %9 : vector<1x64x128xbf16> to vector<64x128xbf16>
    %c0_12 = arith.constant 0 : index
    %c0_13 = arith.constant 0 : index
    %11 = vector.load %arg7[%c0_12, %c0_13] : memref<128x16xbf16, #tpu.memory_space<vmem>>, vector<128x16xbf16>
    %cst_14 = arith.constant dense<0.000000e+00> : vector<64x16xf32>
    %12 = tpu.matmul %10, %11, %cst_14 {dimension_numbers = #tpu.dot_dimension_numbers<[1], [0], [0], [1], [0, 0, 1, 1], [], []>} : vector<64x128xbf16>, vector<128x16xbf16>, vector<64x16xf32> -> vector<64x16xf32>
    %13 = arith.addf %12, %8 : vector<64x16xf32>
    %cst_15 = arith.constant 0.000000e+00 : f32
    %14 = vector.broadcast %cst_15 : f32 to vector<64x16xf32>
    %15 = arith.maximumf %13, %14 : vector<64x16xf32>
    %c0_16 = arith.constant 0 : index
    %c0_17 = arith.constant 0 : index
    %16 = vector.load %arg8[%c0_16, %c0_17] : memref<1x16xf32, #tpu.memory_space<vmem>>, vector<1x16xf32>
    %17 = vector.broadcast %16 : vector<1x16xf32> to vector<64x16xf32>
    %18 = arith.mulf %15, %17 : vector<64x16xf32>
    %cst_18 = arith.constant dense<0.000000e+00> : vector<64xf32>
    %19 = vector.multi_reduction <add>, %18, %cst_18 [1] : vector<64x16xf32> to vector<64xf32>
    %20 = vector.shape_cast %19 : vector<64xf32> to vector<64x1xf32>
    %c0_19 = arith.constant 0 : index
    %c0_20 = arith.constant 0 : index
    %21 = vector.load %arg9[%c0_19, %c0_20] : memref<1x1xf32, #tpu.memory_space<vmem>>, vector<1x1xf32>
    %22 = vector.broadcast %21 : vector<1x1xf32> to vector<64x1xf32>
    %23 = arith.addf %20, %22 : vector<64x1xf32>
    %24 = arith.negf %23 : vector<64x1xf32>
    %25 = math.exp %24 : vector<64x1xf32>
    %cst_21 = arith.constant 1.000000e+00 : f32
    %26 = vector.broadcast %cst_21 : f32 to vector<64x1xf32>
    %27 = arith.addf %26, %25 : vector<64x1xf32>
    %28 = arith.divf %26, %27 : vector<64x1xf32>
    %c0_22 = arith.constant 0 : index
    %c0_23 = arith.constant 0 : index
    %29 = vector.load %arg10[%c0_22, %c0_23] : memref<64x256xf32, #tpu.memory_space<vmem>>, vector<64x256xf32>
    %30 = vector.broadcast %28 : vector<64x1xf32> to vector<64x256xf32>
    %31 = arith.mulf %29, %30 : vector<64x256xf32>
    %cst_24 = arith.constant dense<0.000000e+00> : vector<256xf32>
    %32 = vector.multi_reduction <add>, %31, %cst_24 [0] : vector<64x256xf32> to vector<256xf32>
    %33 = vector.shape_cast %32 : vector<256xf32> to vector<1x256xf32>
    %c0_25 = arith.constant 0 : index
    %c0_26 = arith.constant 0 : index
    %34 = vector.load %arg11[%c0_25, %c0_26] : memref<32x32xbf16, #tpu.memory_space<vmem>>, vector<32x32xbf16>
    %c0_27 = arith.constant 0 : index
    %c0_28 = arith.constant 0 : index
    %c0_29 = arith.constant 0 : index
    %35 = vector.load %arg3[%c0_27, %c0_28, %c0_29] : memref<1x32x256xbf16, #tpu.memory_space<vmem>>, vector<1x32x256xbf16>
    %36 = vector.shape_cast %35 : vector<1x32x256xbf16> to vector<32x256xbf16>
    %cst_30 = arith.constant dense<0.000000e+00> : vector<32x256xf32>
    %37 = tpu.matmul %34, %36, %cst_30 {dimension_numbers = #tpu.dot_dimension_numbers<[1], [0], [0], [1], [0, 0, 1, 1], [], []>} : vector<32x32xbf16>, vector<32x256xbf16>, vector<32x256xf32> -> vector<32x256xf32>
    %38 = vector.broadcast %33 : vector<1x256xf32> to vector<32x256xf32>
    %39 = arith.mulf %37, %38 : vector<32x256xf32>
    %c0_31 = arith.constant 0 : index
    %c0_32 = arith.constant 0 : index
    %40 = vector.load %arg12[%c0_31, %c0_32] : memref<32x1xf32, #tpu.memory_space<vmem>>, vector<32x1xf32>
    %41 = vector.broadcast %40 : vector<32x1xf32> to vector<32x256xf32>
    %42 = arith.addf %39, %41 : vector<32x256xf32>
    %c0_33 = arith.constant 0 : index
    %c0_34 = arith.constant 0 : index
    %c0_35 = arith.constant 0 : index
    %43 = vector.load %arg13[%c0_33, %c0_34, %c0_35] : memref<1x32x256xf32, #tpu.memory_space<vmem>>, vector<1x32x256xf32>
    %44 = vector.shape_cast %43 : vector<1x32x256xf32> to vector<32x256xf32>
    %45 = vector.shape_cast %42 : vector<32x256xf32> to vector<1x32x256xf32>
    tpu.vector_store %arg13[%c0_33, %c0_34, %c0_35], %45 {strides = array<i32>} : memref<1x32x256xf32, #tpu.memory_space<vmem>>, vector<1x32x256xf32>,
    %c0_36 = arith.constant 0 : index
    %c0_37 = arith.constant 0 : index
    %c0_38 = arith.constant 0 : index
    %46 = vector.load %arg14[%c0_36, %c0_37, %c0_38] : memref<1x1x256xf32, #tpu.memory_space<vmem>>, vector<1x1x256xf32>
    %47 = vector.shape_cast %46 : vector<1x1x256xf32> to vector<1x256xf32>
    %48 = vector.shape_cast %33 : vector<1x256xf32> to vector<1x1x256xf32>
    tpu.vector_store %arg14[%c0_36, %c0_37, %c0_38], %48 {strides = array<i32>} : memref<1x1x256xf32, #tpu.memory_space<vmem>>, vector<1x1x256xf32>,
    return
  }
  func.func @transform_0(%arg0: i32) -> (i32, i32, i32) {
    %c0_i32 = arith.constant 0 : i32
    %c0_i32_0 = arith.constant 0 : i32
    %c0_i32_1 = arith.constant 0 : i32
    return %arg0, %c0_i32, %c0_i32_0 : i32, i32, i32
  }
  func.func @transform_1(%arg0: i32) -> (i32, i32, i32) {
    %c0_i32 = arith.constant 0 : i32
    %c0_i32_0 = arith.constant 0 : i32
    %c0_i32_1 = arith.constant 0 : i32
    return %arg0, %c0_i32, %c0_i32_0 : i32, i32, i32
  }
  func.func @transform_2(%arg0: i32) -> (i32, i32, i32) {
    %c0_i32 = arith.constant 0 : i32
    %c0_i32_0 = arith.constant 0 : i32
    %c0_i32_1 = arith.constant 0 : i32
    return %arg0, %c0_i32, %c0_i32_0 : i32, i32, i32
  }
  func.func @transform_3(%arg0: i32) -> (i32, i32) {
    %c0_i32 = arith.constant 0 : i32
    %c0_i32_0 = arith.constant 0 : i32
    %c0_i32_1 = arith.constant 0 : i32
    return %c0_i32, %c0_i32_0 : i32, i32
  }
  func.func @transform_4(%arg0: i32) -> (i32, i32) {
    %c0_i32 = arith.constant 0 : i32
    %c0_i32_0 = arith.constant 0 : i32
    %c0_i32_1 = arith.constant 0 : i32
    return %c0_i32, %c0_i32_0 : i32, i32
  }
  func.func @transform_5(%arg0: i32) -> (i32, i32) {
    %c0_i32 = arith.constant 0 : i32
    %c0_i32_0 = arith.constant 0 : i32
    %c0_i32_1 = arith.constant 0 : i32
    return %c0_i32, %c0_i32_0 : i32, i32
  }
  func.func @transform_6(%arg0: i32) -> (i32, i32) {
    %c0_i32 = arith.constant 0 : i32
    %c0_i32_0 = arith.constant 0 : i32
    %c0_i32_1 = arith.constant 0 : i32
    return %c0_i32, %c0_i32_0 : i32, i32
  }
  func.func @transform_7(%arg0: i32) -> (i32, i32) {
    %c0_i32 = arith.constant 0 : i32
    %c0_i32_0 = arith.constant 0 : i32
    %c0_i32_1 = arith.constant 0 : i32
    return %c0_i32, %c0_i32_0 : i32, i32
  }
  func.func @transform_8(%arg0: i32) -> (i32, i32) {
    %c0_i32 = arith.constant 0 : i32
    %c0_i32_0 = arith.constant 0 : i32
    %c0_i32_1 = arith.constant 0 : i32
    return %c0_i32, %c0_i32_0 : i32, i32
  }
  func.func @transform_9(%arg0: i32) -> (i32, i32) {
    %c0_i32 = arith.constant 0 : i32
    %c0_i32_0 = arith.constant 0 : i32
    %c0_i32_1 = arith.constant 0 : i32
    return %c0_i32, %c0_i32_0 : i32, i32
  }
  func.func @transform_10(%arg0: i32) -> (i32, i32) {
    %c0_i32 = arith.constant 0 : i32
    %c0_i32_0 = arith.constant 0 : i32
    %c0_i32_1 = arith.constant 0 : i32
    return %c0_i32, %c0_i32_0 : i32, i32
  }
  func.func @transform_11(%arg0: i32) -> (i32, i32) {
    %c0_i32 = arith.constant 0 : i32
    %c0_i32_0 = arith.constant 0 : i32
    %c0_i32_1 = arith.constant 0 : i32
    return %c0_i32, %c0_i32_0 : i32, i32
  }
  func.func @transform_12(%arg0: i32) -> (i32, i32, i32) {
    %c0_i32 = arith.constant 0 : i32
    %c0_i32_0 = arith.constant 0 : i32
    %c0_i32_1 = arith.constant 0 : i32
    return %arg0, %c0_i32, %c0_i32_0 : i32, i32, i32
  }
  func.func @transform_13(%arg0: i32) -> (i32, i32, i32) {
    %c0_i32 = arith.constant 0 : i32
    %c0_i32_0 = arith.constant 0 : i32
    %c0_i32_1 = arith.constant 0 : i32
    return %arg0, %c0_i32, %c0_i32_0 : i32, i32, i32
  }
}

</mosaic_0001>

<llo_original>
// kernel: grid_attention_block_2d.1
$region0: #{grid_attention_block_2d.1}
  #allocation0 [shape = 'u32[]', space=smem, size = 0x4, offset = 0x4, fixed_abs, tag = 'smem constant byte address 0x4 - core index']
  #allocation1 [shape = 'u32[144,128]{1,0:T(1,128)}', space=vmem, size = 0x12000, scoped, tag = 'internal scratch']
  #allocation2 [shape = 'f32[1,1]{1,0:T(1,128)S(1)}', space=vmem, size = 0x200, scoped, tag = 'scoped memory for grid_attention_block_2d.1']
  %s0 = inlined_call_operand.vmem [shape: f32[2,16,64], index: 0, kind: input, shape index: {}]
  %s1 = inlined_call_operand.vmem [shape: bf16[2,64,128], index: 1, kind: input, shape index: {}]
  %s2 = inlined_call_operand.vmem [shape: bf16[2,32,256], index: 2, kind: input, shape index: {}]
  %s3 = inlined_call_operand.vmem [shape: f32[64,16], index: 3, kind: input, shape index: {}]
  %s4 = inlined_call_operand.vmem [shape: f32[1,16], index: 4, kind: input, shape index: {}]
  %s5 = inlined_call_operand.vmem [shape: f32[64,16], index: 5, kind: input, shape index: {}]
  %s6 = inlined_call_operand.vmem [shape: bf16[128,16], index: 6, kind: input, shape index: {}]
  %s7 = inlined_call_operand.vmem [shape: f32[1,16], index: 7, kind: input, shape index: {}]
  %s8 = inlined_call_operand.<no memory space> [shape: f32[1,1], index: 8, kind: input, shape index: {}]
  %s9 = inlined_call_operand.vmem [shape: f32[64,256], index: 9, kind: input, shape index: {}]
  %s10 = inlined_call_operand.vmem [shape: bf16[32,32], index: 10, kind: input, shape index: {}]
  %s11 = inlined_call_operand.vmem [shape: f32[32,1], index: 11, kind: input, shape index: {}]
  %s12 = inlined_call_operand.vmem [shape: f32[2,32,256], index: 12, kind: output, shape index: {0}]
  %s13 = inlined_call_operand.vmem [shape: f32[2,1,256], index: 13, kind: output, shape index: {1}]
  %14 = xla_tuple %s12, %s13
  %s15 = sld [smem:[#allocation0]]
  $region89: #{grid_attention_block_2d.1} parent=0
    _
  %s17 = ssub.s32 1, %s15
  %s18 = scalar_select 0, %s17, %s15
  %v19 = vstv %s8
  %20 = vst [vmem:[#allocation2] sm:$0x1] %v19
  loop: start=0, step=1, limit=4
  $region2: #{grid_attention_block_2d.1} parent=0 // loop_pre_header
    _
  $region3: #{grid_attention_block_2d.1} parent=0 // loop_header
    %s22 = sphi 0, %s26
    %p23 = scmp.ge.s32.totalorder %s22, 4
    %s32 = sphi 0, %s34
    %s35 = sphi 0, %s32
    %s36 = sphi 0, %s35
    %s52 = sphi 0, %s36
    %s58 = sphi 0, %s60
    %s61 = sphi 0, %s58
    %s62 = sphi 0, %s61
    %s78 = sphi 0, %s62
    %s84 = sphi 0, %s86
    %s87 = sphi 0, %s84
    %s88 = sphi 0, %s87
    %s104 = sphi 0, %s88
    %s108 = sphi 0, %s108
    %s110 = sphi 0, %s108
    %s111 = sphi 0, %s110
    %s125 = sphi 0, %s111
    %s129 = sphi 0, %s129
    %s131 = sphi 0, %s129
    %s132 = sphi 0, %s131
    %s146 = sphi 0, %s132
    %s150 = sphi 0, %s150
    %s152 = sphi 0, %s150
    %s153 = sphi 0, %s152
    %s167 = sphi 0, %s153
    %s171 = sphi 0, %s171
    %s173 = sphi 0, %s171
    %s174 = sphi 0, %s173
    %s188 = sphi 0, %s174
    %s192 = sphi 0, %s192
    %s194 = sphi 0, %s192
    %s195 = sphi 0, %s194
    %s209 = sphi 0, %s195
    %s213 = sphi 0, %s213
    %s215 = sphi 0, %s213
    %s216 = sphi 0, %s215
    %s230 = sphi 0, %s216
    %s234 = sphi 0, %s234
    %s236 = sphi 0, %s234
    %s237 = sphi 0, %s236
    %s251 = sphi 0, %s237
    %s255 = sphi 0, %s255
    %s257 = sphi 0, %s255
    %s258 = sphi 0, %s257
    %s272 = sphi 0, %s258
    %s276 = sphi 0, %s276
    %s278 = sphi 0, %s276
    %s279 = sphi 0, %s278
    %s293 = sphi 0, %s279
    %s299 = sphi 0, %s301
    %s302 = sphi 0, %s299
    %s303 = sphi 0, %s302
    %s319 = sphi 0, %s303
    %s325 = sphi 0, %s327
    %s328 = sphi 0, %s325
    %s329 = sphi 0, %s328
    %s345 = sphi 0, %s329
  $region4: #{grid_attention_block_2d.1} parent=0 // loop_header_branch
    %25 = sbr.rel (%p23) target = $region8
  $region5: #{grid_attention_block_2d.1} parent=0 // loop_body
    %s27 = ssub.s32 %s22, 1
    %s28 = ssub.s32 %s22, 2
    %s29 = sadd.s32 %s22, 1
    %s30 = ssub.s32 %s22, %s29
    %p31 = scmp.eq.s32.totalorder %s30, 0
    %s33 = sadd.s32 %s32, 1
    %s34 = scalar_select %p31, %s32, %s33
    %p37 = pneg %p31
    %p38 = scmp.eq.s32.totalorder %s22, 1
    %p39 = por %p37, %p38
    %p40 = scmp.ne.s32.totalorder %s32, %s35
    %p41 = scmp.eq.s32.totalorder %s22, 0
    %p42 = por %p40, %p41
    %p43 = scmp.ne.s32.totalorder %s32, %s35
    %p44 = scmp.eq.s32.totalorder %s27, 1
    %p45 = por %p43, %p44
    %p46 = scmp.ne.s32.totalorder %s35, %s36
    %p47 = scmp.eq.s32.totalorder %s27, 0
    %p48 = por %p46, %p47
    %p49 = scmp.ne.s32.totalorder %s35, %s36
    %p50 = scmp.eq.s32.totalorder %s28, 1
    %p51 = por %p49, %p50
    %p53 = scmp.ne.s32.totalorder %s36, %s52
    %p54 = scmp.eq.s32.totalorder %s28, 0
    %p55 = por %p53, %p54
    %s56 = ssub.s32 %s22, %s29
    %p57 = scmp.eq.s32.totalorder %s56, 0
    %s59 = sadd.s32 %s58, 1
    %s60 = scalar_select %p57, %s58, %s59
    %p63 = pneg %p57
    %p64 = scmp.eq.s32.totalorder %s22, 1
    %p65 = por %p63, %p64
    %p66 = scmp.ne.s32.totalorder %s58, %s61
    %p67 = scmp.eq.s32.totalorder %s22, 0
    %p68 = por %p66, %p67
    %p69 = scmp.ne.s32.totalorder %s58, %s61
    %p70 = scmp.eq.s32.totalorder %s27, 1
    %p71 = por %p69, %p70
    %p72 = scmp.ne.s32.totalorder %s61, %s62
    %p73 = scmp.eq.s32.totalorder %s27, 0
    %p74 = por %p72, %p73
    %p75 = scmp.ne.s32.totalorder %s61, %s62
    %p76 = scmp.eq.s32.totalorder %s28, 1
    %p77 = por %p75, %p76
    %p79 = scmp.ne.s32.totalorder %s62, %s78
    %p80 = scmp.eq.s32.totalorder %s28, 0
    %p81 = por %p79, %p80
    %s82 = ssub.s32 %s22, %s29
    %p83 = scmp.eq.s32.totalorder %s82, 0
    %s85 = sadd.s32 %s84, 1
    %s86 = scalar_select %p83, %s84, %s85
    %p89 = pneg %p83
    %p90 = scmp.eq.s32.totalorder %s22, 1
    %p91 = por %p89, %p90
    %p92 = scmp.ne.s32.totalorder %s84, %s87
    %p93 = scmp.eq.s32.totalorder %s22, 0
    %p94 = por %p92, %p93
    %p95 = scmp.ne.s32.totalorder %s84, %s87
    %p96 = scmp.eq.s32.totalorder %s27, 1
    %p97 = por %p95, %p96
    %p98 = scmp.ne.s32.totalorder %s87, %s88
    %p99 = scmp.eq.s32.totalorder %s27, 0
    %p100 = por %p98, %p99
    %p101 = scmp.ne.s32.totalorder %s87, %s88
    %p102 = scmp.eq.s32.totalorder %s28, 1
    %p103 = por %p101, %p102
    %p105 = scmp.ne.s32.totalorder %s88, %s104
    %p106 = scmp.eq.s32.totalorder %s28, 0
    %p107 = por %p105, %p106
    %s109 = sadd.s32 %s108, 1
    %p112 = scmp.eq.s32.totalorder %s22, 1
    %p113 = scmp.ne.s32.totalorder %s108, %s110
    %p114 = scmp.eq.s32.totalorder %s22, 0
    %p115 = por %p113, %p114
    %p116 = scmp.ne.s32.totalorder %s108, %s110
    %p117 = scmp.eq.s32.totalorder %s27, 1
    %p118 = por %p116, %p117
    %p119 = scmp.ne.s32.totalorder %s110, %s111
    %p120 = scmp.eq.s32.totalorder %s27, 0
    %p121 = por %p119, %p120
    %p122 = scmp.ne.s32.totalorder %s110, %s111
    %p123 = scmp.eq.s32.totalorder %s28, 1
    %p124 = por %p122, %p123
    %p126 = scmp.ne.s32.totalorder %s111, %s125
    %p127 = scmp.eq.s32.totalorder %s28, 0
    %p128 = por %p126, %p127
    %s130 = sadd.s32 %s129, 1
    %p133 = scmp.eq.s32.totalorder %s22, 1
    %p134 = scmp.ne.s32.totalorder %s129, %s131
    %p135 = scmp.eq.s32.totalorder %s22, 0
    %p136 = por %p134, %p135
    %p137 = scmp.ne.s32.totalorder %s129, %s131
    %p138 = scmp.eq.s32.totalorder %s27, 1
    %p139 = por %p137, %p138
    %p140 = scmp.ne.s32.totalorder %s131, %s132
    %p141 = scmp.eq.s32.totalorder %s27, 0
    %p142 = por %p140, %p141
    %p143 = scmp.ne.s32.totalorder %s131, %s132
    %p144 = scmp.eq.s32.totalorder %s28, 1
    %p145 = por %p143, %p144
    %p147 = scmp.ne.s32.totalorder %s132, %s146
    %p148 = scmp.eq.s32.totalorder %s28, 0
    %p149 = por %p147, %p148
    %s151 = sadd.s32 %s150, 1
    %p154 = scmp.eq.s32.totalorder %s22, 1
    %p155 = scmp.ne.s32.totalorder %s150, %s152
    %p156 = scmp.eq.s32.totalorder %s22, 0
    %p157 = por %p155, %p156
    %p158 = scmp.ne.s32.totalorder %s150, %s152
    %p159 = scmp.eq.s32.totalorder %s27, 1
    %p160 = por %p158, %p159
    %p161 = scmp.ne.s32.totalorder %s152, %s153
    %p162 = scmp.eq.s32.totalorder %s27, 0
    %p163 = por %p161, %p162
    %p164 = scmp.ne.s32.totalorder %s152, %s153
    %p165 = scmp.eq.s32.totalorder %s28, 1
    %p166 = por %p164, %p165
    %p168 = scmp.ne.s32.totalorder %s153, %s167
    %p169 = scmp.eq.s32.totalorder %s28, 0
    %p170 = por %p168, %p169
    %s172 = sadd.s32 %s171, 1
    %p175 = scmp.eq.s32.totalorder %s22, 1
    %p176 = scmp.ne.s32.totalorder %s171, %s173
    %p177 = scmp.eq.s32.totalorder %s22, 0
    %p178 = por %p176, %p177
    %p179 = scmp.ne.s32.totalorder %s171, %s173
    %p180 = scmp.eq.s32.totalorder %s27, 1
    %p181 = por %p179, %p180
    %p182 = scmp.ne.s32.totalorder %s173, %s174
    %p183 = scmp.eq.s32.totalorder %s27, 0
    %p184 = por %p182, %p183
    %p185 = scmp.ne.s32.totalorder %s173, %s174
    %p186 = scmp.eq.s32.totalorder %s28, 1
    %p187 = por %p185, %p186
    %p189 = scmp.ne.s32.totalorder %s174, %s188
    %p190 = scmp.eq.s32.totalorder %s28, 0
    %p191 = por %p189, %p190
    %s193 = sadd.s32 %s192, 1
    %p196 = scmp.eq.s32.totalorder %s22, 1
    %p197 = scmp.ne.s32.totalorder %s192, %s194
    %p198 = scmp.eq.s32.totalorder %s22, 0
    %p199 = por %p197, %p198
    %p200 = scmp.ne.s32.totalorder %s192, %s194
    %p201 = scmp.eq.s32.totalorder %s27, 1
    %p202 = por %p200, %p201
    %p203 = scmp.ne.s32.totalorder %s194, %s195
    %p204 = scmp.eq.s32.totalorder %s27, 0
    %p205 = por %p203, %p204
    %p206 = scmp.ne.s32.totalorder %s194, %s195
    %p207 = scmp.eq.s32.totalorder %s28, 1
    %p208 = por %p206, %p207
    %p210 = scmp.ne.s32.totalorder %s195, %s209
    %p211 = scmp.eq.s32.totalorder %s28, 0
    %p212 = por %p210, %p211
    %s214 = sadd.s32 %s213, 1
    %p217 = scmp.eq.s32.totalorder %s22, 1
    %p218 = scmp.ne.s32.totalorder %s213, %s215
    %p219 = scmp.eq.s32.totalorder %s22, 0
    %p220 = por %p218, %p219
    %p221 = scmp.ne.s32.totalorder %s213, %s215
    %p222 = scmp.eq.s32.totalorder %s27, 1
    %p223 = por %p221, %p222
    %p224 = scmp.ne.s32.totalorder %s215, %s216
    %p225 = scmp.eq.s32.totalorder %s27, 0
    %p226 = por %p224, %p225
    %p227 = scmp.ne.s32.totalorder %s215, %s216
    %p228 = scmp.eq.s32.totalorder %s28, 1
    %p229 = por %p227, %p228
    %p231 = scmp.ne.s32.totalorder %s216, %s230
    %p232 = scmp.eq.s32.totalorder %s28, 0
    %p233 = por %p231, %p232
    %s235 = sadd.s32 %s234, 1
    %p238 = scmp.eq.s32.totalorder %s22, 1
    %p239 = scmp.ne.s32.totalorder %s234, %s236
    %p240 = scmp.eq.s32.totalorder %s22, 0
    %p241 = por %p239, %p240
    %p242 = scmp.ne.s32.totalorder %s234, %s236
    %p243 = scmp.eq.s32.totalorder %s27, 1
    %p244 = por %p242, %p243
    %p245 = scmp.ne.s32.totalorder %s236, %s237
    %p246 = scmp.eq.s32.totalorder %s27, 0
    %p247 = por %p245, %p246
    %p248 = scmp.ne.s32.totalorder %s236, %s237
    %p249 = scmp.eq.s32.totalorder %s28, 1
    %p250 = por %p248, %p249
    %p252 = scmp.ne.s32.totalorder %s237, %s251
    %p253 = scmp.eq.s32.totalorder %s28, 0
    %p254 = por %p252, %p253
    %s256 = sadd.s32 %s255, 1
    %p259 = scmp.eq.s32.totalorder %s22, 1
    %p260 = scmp.ne.s32.totalorder %s255, %s257
    %p261 = scmp.eq.s32.totalorder %s22, 0
    %p262 = por %p260, %p261
    %p263 = scmp.ne.s32.totalorder %s255, %s257
    %p264 = scmp.eq.s32.totalorder %s27, 1
    %p265 = por %p263, %p264
    %p266 = scmp.ne.s32.totalorder %s257, %s258
    %p267 = scmp.eq.s32.totalorder %s27, 0
    %p268 = por %p266, %p267
    %p269 = scmp.ne.s32.totalorder %s257, %s258
    %p270 = scmp.eq.s32.totalorder %s28, 1
    %p271 = por %p269, %p270
    %p273 = scmp.ne.s32.totalorder %s258, %s272
    %p274 = scmp.eq.s32.totalorder %s28, 0
    %p275 = por %p273, %p274
    %s277 = sadd.s32 %s276, 1
    %p280 = scmp.eq.s32.totalorder %s22, 1
    %p281 = scmp.ne.s32.totalorder %s276, %s278
    %p282 = scmp.eq.s32.totalorder %s22, 0
    %p283 = por %p281, %p282
    %p284 = scmp.ne.s32.totalorder %s276, %s278
    %p285 = scmp.eq.s32.totalorder %s27, 1
    %p286 = por %p284, %p285
    %p287 = scmp.ne.s32.totalorder %s278, %s279
    %p288 = scmp.eq.s32.totalorder %s27, 0
    %p289 = por %p287, %p288
    %p290 = scmp.ne.s32.totalorder %s278, %s279
    %p291 = scmp.eq.s32.totalorder %s28, 1
    %p292 = por %p290, %p291
    %p294 = scmp.ne.s32.totalorder %s279, %s293
    %p295 = scmp.eq.s32.totalorder %s28, 0
    %p296 = por %p294, %p295
    %s297 = ssub.s32 %s22, %s29
    %p298 = scmp.eq.s32.totalorder %s297, 0
    %s300 = sadd.s32 %s299, 1
    %s301 = scalar_select %p298, %s299, %s300
    %p304 = pneg %p298
    %p305 = scmp.eq.s32.totalorder %s22, 1
    %p306 = por %p304, %p305
    %p307 = scmp.ne.s32.totalorder %s299, %s302
    %p308 = scmp.eq.s32.totalorder %s22, 0
    %p309 = por %p307, %p308
    %p310 = scmp.ne.s32.totalorder %s299, %s302
    %p311 = scmp.eq.s32.totalorder %s27, 1
    %p312 = por %p310, %p311
    %p313 = scmp.ne.s32.totalorder %s302, %s303
    %p314 = scmp.eq.s32.totalorder %s27, 0
    %p315 = por %p313, %p314
    %p316 = scmp.ne.s32.totalorder %s302, %s303
    %p317 = scmp.eq.s32.totalorder %s28, 1
    %p318 = por %p316, %p317
    %p320 = scmp.ne.s32.totalorder %s303, %s319
    %p321 = scmp.eq.s32.totalorder %s28, 0
    %p322 = por %p320, %p321
    %s323 = ssub.s32 %s22, %s29
    %p324 = scmp.eq.s32.totalorder %s323, 0
    %s326 = sadd.s32 %s325, 1
    %s327 = scalar_select %p324, %s325, %s326
    %p330 = pneg %p324
    %p331 = scmp.eq.s32.totalorder %s22, 1
    %p332 = por %p330, %p331
    %p333 = scmp.ne.s32.totalorder %s325, %s328
    %p334 = scmp.eq.s32.totalorder %s22, 0
    %p335 = por %p333, %p334
    %p336 = scmp.ne.s32.totalorder %s325, %s328
    %p337 = scmp.eq.s32.totalorder %s27, 1
    %p338 = por %p336, %p337
    %p339 = scmp.ne.s32.totalorder %s328, %s329
    %p340 = scmp.eq.s32.totalorder %s27, 0
    %p341 = por %p339, %p340
    %p342 = scmp.ne.s32.totalorder %s328, %s329
    %p343 = scmp.eq.s32.totalorder %s28, 1
    %p344 = por %p342, %p343
    %p346 = scmp.ne.s32.totalorder %s329, %s345
    %p347 = scmp.eq.s32.totalorder %s28, 0
    %p348 = por %p346, %p347
    %p349 = scmp.le.s32.totalorder 1, %s22
    %p350 = scmp.lt.s32.totalorder %s22, 3
    %p351 = pnand %p349, %p350
    %p352 = pneg %p351
    // Predicated region
    $region9: #{grid_attention_block_2d.1} parent=5 // pred_check
      _
    $region10: #{grid_attention_block_2d.1} parent=5 // pred_check_branch
      %354 = sbr.rel (%p351) target = $region12
    $region11: #{grid_attention_block_2d.1} parent=5 // pred_region
      %s355 = ssub.s32 %s22, 1
      // Predicated region
      $region13: #{grid_attention_block_2d.1} parent=11 // pred_check
        %p356 = pneg %p121
      $region14: #{grid_attention_block_2d.1} parent=11 // pred_check_branch
        %358 = sbr.rel (%p356) target = $region16
      $region15: #{grid_attention_block_2d.1} parent=11 // pred_region
        _
      $region16: #{grid_attention_block_2d.1} parent=11 // pred_fallthru
        _
      // Predicated region
      $region17: #{grid_attention_block_2d.1} parent=11 // pred_check
        %p359 = pneg %p142
      $region18: #{grid_attention_block_2d.1} parent=11 // pred_check_branch
        %361 = sbr.rel (%p359) target = $region20
      $region19: #{grid_attention_block_2d.1} parent=11 // pred_region
        _
      $region20: #{grid_attention_block_2d.1} parent=11 // pred_fallthru
        _
      // Predicated region
      $region21: #{grid_attention_block_2d.1} parent=11 // pred_check
        %p362 = pneg %p163
      $region22: #{grid_attention_block_2d.1} parent=11 // pred_check_branch
        %364 = sbr.rel (%p362) target = $region24
      $region23: #{grid_attention_block_2d.1} parent=11 // pred_region
        _
      $region24: #{grid_attention_block_2d.1} parent=11 // pred_fallthru
        _
      // Predicated region
      $region25: #{grid_attention_block_2d.1} parent=11 // pred_check
        %p365 = pneg %p184
      $region26: #{grid_attention_block_2d.1} parent=11 // pred_check_branch
        %367 = sbr.rel (%p365) target = $region28
      $region27: #{grid_attention_block_2d.1} parent=11 // pred_region
        _
      $region28: #{grid_attention_block_2d.1} parent=11 // pred_fallthru
        _
      // Predicated region
      $region29: #{grid_attention_block_2d.1} parent=11 // pred_check
        %p368 = pneg %p205
      $region30: #{grid_attention_block_2d.1} parent=11 // pred_check_branch
        %370 = sbr.rel (%p368) target = $region32
      $region31: #{grid_attention_block_2d.1} parent=11 // pred_region
        _
      $region32: #{grid_attention_block_2d.1} parent=11 // pred_fallthru
        _
      // Predicated region
      $region33: #{grid_attention_block_2d.1} parent=11 // pred_check
        %p371 = pneg %p226
      $region34: #{grid_attention_block_2d.1} parent=11 // pred_check_branch
        %373 = sbr.rel (%p371) target = $region36
      $region35: #{grid_attention_block_2d.1} parent=11 // pred_region
        _
      $region36: #{grid_attention_block_2d.1} parent=11 // pred_fallthru
        _
      // Predicated region
      $region37: #{grid_attention_block_2d.1} parent=11 // pred_check
        %p374 = pneg %p247
      $region38: #{grid_attention_block_2d.1} parent=11 // pred_check_branch
        %376 = sbr.rel (%p374) target = $region40
      $region39: #{grid_attention_block_2d.1} parent=11 // pred_region
        _
      $region40: #{grid_attention_block_2d.1} parent=11 // pred_fallthru
        _
      // Predicated region
      $region41: #{grid_attention_block_2d.1} parent=11 // pred_check
        %p377 = pneg %p268
      $region42: #{grid_attention_block_2d.1} parent=11 // pred_check_branch
        %379 = sbr.rel (%p377) target = $region44
      $region43: #{grid_attention_block_2d.1} parent=11 // pred_region
        _
      $region44: #{grid_attention_block_2d.1} parent=11 // pred_fallthru
        _
      // Predicated region
      $region45: #{grid_attention_block_2d.1} parent=11 // pred_check
        %p380 = pneg %p289
      $region46: #{grid_attention_block_2d.1} parent=11 // pred_check_branch
        %382 = sbr.rel (%p380) target = $region48
      $region47: #{grid_attention_block_2d.1} parent=11 // pred_region
        _
      $region48: #{grid_attention_block_2d.1} parent=11 // pred_fallthru
        _
    $region12: #{grid_attention_block_2d.1} parent=5 // pred_fallthru
      _
    %p383 = scmp.lt.s32.totalorder %s22, 2
    // Predicated region
    $region49: #{grid_attention_block_2d.1} parent=5 // pred_check
      %p384 = pneg %p383
    $region50: #{grid_attention_block_2d.1} parent=5 // pred_check_branch
      %386 = sbr.rel (%p384) target = $region52
    $region51: #{grid_attention_block_2d.1} parent=5 // pred_region
      // Predicated region
      $region53: #{grid_attention_block_2d.1} parent=51 // pred_check
        %p387 = pneg %p42
      $region54: #{grid_attention_block_2d.1} parent=51 // pred_check_branch
        %389 = sbr.rel (%p387) target = $region56
      $region55: #{grid_attention_block_2d.1} parent=51 // pred_region
        %p390 = scmp.lt.s32.totalorder %s22, 1
        %s391 = scalar_select %p390, %s22, 1
        %s392 = smul.addr %s391, 2
        %s393 = smul.addr %s392, 8
        %s394 = scalar_lea.vmem %s0, %s393
      $region56: #{grid_attention_block_2d.1} parent=51 // pred_fallthru
        _
      // Predicated region
      $region57: #{grid_attention_block_2d.1} parent=51 // pred_check
        %p395 = pneg %p68
      $region58: #{grid_attention_block_2d.1} parent=51 // pred_check_branch
        %397 = sbr.rel (%p395) target = $region60
      $region59: #{grid_attention_block_2d.1} parent=51 // pred_region
        %p398 = scmp.lt.s32.totalorder %s22, 1
        %s399 = scalar_select %p398, %s22, 1
        %s400 = smul.addr %s399, 8
        %s401 = smul.addr %s400, 4
        %s402 = scalar_lea.vmem %s1, %s401
      $region60: #{grid_attention_block_2d.1} parent=51 // pred_fallthru
        _
      // Predicated region
      $region61: #{grid_attention_block_2d.1} parent=51 // pred_check
        %p403 = pneg %p94
      $region62: #{grid_attention_block_2d.1} parent=51 // pred_check_branch
        %405 = sbr.rel (%p403) target = $region64
      $region63: #{grid_attention_block_2d.1} parent=51 // pred_region
        %p406 = scmp.lt.s32.totalorder %s22, 1
        %s407 = scalar_select %p406, %s22, 1
        %s408 = smul.addr %s407, 8
        %s409 = smul.addr %s408, 4
        %s410 = scalar_lea.vmem %s2, %s409
      $region64: #{grid_attention_block_2d.1} parent=51 // pred_fallthru
        _
    $region52: #{grid_attention_block_2d.1} parent=5 // pred_fallthru
      _
    %p411 = scmp.le.s32.totalorder 1, %s22
    %p412 = scmp.lt.s32.totalorder %s22, 3
    %p413 = pnand %p411, %p412
    %p414 = pneg %p413
    // Predicated region
    $region65: #{grid_attention_block_2d.1} parent=5 // pred_check
      _
    $region66: #{grid_attention_block_2d.1} parent=5 // pred_check_branch
      %416 = sbr.rel (%p413) target = $region68
    $region67: #{grid_attention_block_2d.1} parent=5 // pred_region
      %s417 = ssub.s32 %s22, 1
      %p418 = scmp.lt.s32.totalorder %s27, 1
      %s419 = scalar_select %p418, %s27, 1
      %s420 = smul.addr %s419, 2
      %s421 = smul.addr %s420, 8
      %s422 = scalar_lea.vmem %s0, %s421
      %p423 = pneg %p48
      %p424 = pneg %p45
      %p425 = scmp.lt.s32.totalorder %s27, 1
      %s426 = scalar_select %p425, %s27, 1
      %s427 = smul.addr %s426, 8
      %s428 = smul.addr %s427, 4
      %s429 = scalar_lea.vmem %s1, %s428
      %p430 = pneg %p74
      %p431 = pneg %p71
      %p432 = scmp.lt.s32.totalorder %s27, 1
      %s433 = scalar_select %p432, %s27, 1
      %s434 = smul.addr %s433, 8
      %s435 = smul.addr %s434, 4
      %s436 = scalar_lea.vmem %s2, %s435
      %p437 = pneg %p100
      %p438 = pneg %p97
      %p439 = pneg %p121
      %p440 = pneg %p118
      %p441 = pneg %p142
      %p442 = pneg %p139
      %p443 = pneg %p163
      %p444 = pneg %p160
      %p445 = pneg %p184
      %p446 = pneg %p181
      %p447 = pneg %p205
      %p448 = pneg %p202
      %p449 = pneg %p226
      %p450 = pneg %p223
      %p451 = pneg %p247
      %p452 = pneg %p244
      %p453 = pneg %p268
      %p454 = pneg %p265
      %p455 = pneg %p289
      %p456 = pneg %p286
      %p457 = pneg %p315
      %p458 = pneg %p312
      %p459 = scmp.lt.s32.totalorder %s27, 1
      %s460 = scalar_select %p459, %s27, 1
      %s461 = smul.addr %s460, 8
      %s462 = smul.addr %s461, 8
      %s463 = scalar_lea.vmem %s12, %s462
      %p464 = pneg %p341
      %p465 = pneg %p338
      %p466 = scmp.lt.s32.totalorder %s27, 1
      %s467 = scalar_select %p466, %s27, 1
      %s468 = smul.addr %s467, 2
      %s469 = scalar_lea.vmem %s13, %s468
      %p470 = scmp.lt.s32.totalorder %s27, 1
      %s471 = scalar_select %p470, %s27, 1
      %s472 = smul.addr %s471, 2
      %s473 = smul.addr %s472, 8
      %s474 = scalar_lea.vmem %s0, %s473
      %p475 = scmp.lt.s32.totalorder %s27, 1
      %s476 = scalar_select %p475, %s27, 1
      %s477 = smul.addr %s476, 8
      %s478 = smul.addr %s477, 4
      %s479 = scalar_lea.vmem %s1, %s478
      %p480 = scmp.lt.s32.totalorder %s27, 1
      %s481 = scalar_select %p480, %s27, 1
      %s482 = smul.addr %s481, 8
      %s483 = smul.addr %s482, 4
      %s484 = scalar_lea.vmem %s2, %s483
      %p485 = scmp.lt.s32.totalorder %s27, 1
      %s486 = scalar_select %p485, %s27, 1
      %s487 = smul.addr %s486, 8
      %s488 = smul.addr %s487, 8
      %s489 = scalar_lea.vmem %s12, %s488
      %p490 = scmp.lt.s32.totalorder %s27, 1
      %s491 = scalar_select %p490, %s27, 1
      %s492 = smul.addr %s491, 2
      %s493 = scalar_lea.vmem %s13, %s492
      %v495 = vld [vmem:[%s474] sm:$0xff]
      %v496 = vld [vmem:[%s474 + $0x8] sm:$0xff]
      %v497 = vld [vmem:[%s3] sm:$0xff]
      %v498 = vld [vmem:[%s3 + $0x8] sm:$0xff]
      %v499 = vld [vmem:[%s3 + $0x10] sm:$0xff]
      %v500 = vld [vmem:[%s3 + $0x18] sm:$0xff]
      %v501 = vld [vmem:[%s3 + $0x20] sm:$0xff]
      %v502 = vld [vmem:[%s3 + $0x28] sm:$0xff]
      %v503 = vld [vmem:[%s3 + $0x30] sm:$0xff]
      %v504 = vld [vmem:[%s3 + $0x38] sm:$0xff]
      %v505 = vld [vmem:[%s4] sm:$0x1]
      %v507 = vlaneseq
      %v508 = vshrl.u32 %v507, 7
      %v509 = vsub.s32 0, %v508
      %v510 = vrot.slane %v505, %v509
      %vm512 = vcmask 523264
      %v514 = vsel %vm512, %v495, 0
      %v517 = vsel %vm512, %v496, 0
      %519 = vmatprep.subr.mxu0 0.0
      %520 = vmatpush1.msra.mxu0 %v497
      %521 = vmatprep.subr.mxu0 0.0
      %522 = vmatpush1.msra.mxu0 %v498
      %523 = vmatprep.subr.mxu0 0.0
      %524 = vmatpush1.msra.mxu0 %v499
      %525 = vmatprep.subr.mxu0 0.0
      %526 = vmatpush1.msra.mxu0 %v500
      %527 = vmatprep.subr.mxu0 0.0
      %528 = vmatpush1.msra.mxu0 %v501
      %529 = vmatprep.subr.mxu0 0.0
      %530 = vmatpush1.msra.mxu0 %v502
      %531 = vmatprep.subr.mxu0 0.0
      %532 = vmatpush1.msra.mxu0 %v503
      %533 = vmatprep.subr.mxu0 0.0
      %534 = vmatpush1.msra.mxu0 %v504
      %535 = vmatprep.subr.mxu0 0.0
      %536 = vmatpush1.msra.mxu0 0.0
      %537 = vmatprep.subr.mxu0 0.0
      %538 = vmatpush1.msra.mxu0 0.0
      %539 = vmatprep.subr.mxu0 0.0
      %540 = vmatpush1.msra.mxu0 0.0
      %541 = vmatprep.subr.mxu0 0.0
      %542 = vmatpush1.msra.mxu0 0.0
      %543 = vmatprep.subr.mxu0 0.0
      %544 = vmatpush1.msra.mxu0 0.0
      %545 = vmatprep.subr.mxu0 0.0
      %546 = vmatpush1.msra.mxu0 0.0
      %547 = vmatprep.subr.mxu0 0.0
      %548 = vmatpush1.msra.mxu0 0.0
      %549 = vmatprep.subr.mxu0 0.0
      %550 = vmatpush1.msra.mxu0 0.0
      %551 = vmatprep.subr.mxu0 0.0
      %552 = vmatpush1.msra.mxu0 0.0
      %553 = vmatprep.subr.mxu0 0.0
      %554 = vmatpush1.msra.mxu0 0.0
      %555 = vmatprep.subr.mxu0 0.0
      %556 = vmatpush1.msra.mxu0 0.0
      %557 = vmatprep.subr.mxu0 0.0
      %558 = vmatpush1.msra.mxu0 0.0
      %559 = vmatprep.subr.mxu0 0.0
      %560 = vmatpush1.msra.mxu0 0.0
      %561 = vmatprep.subr.mxu0 0.0
      %562 = vmatpush1.msra.mxu0 0.0
      %563 = vmatprep.subr.mxu0 0.0
      %564 = vmatpush1.msra.mxu0 0.0
      %565 = vmatprep.subr.mxu0 0.0
      %566 = vmatpush1.msra.mxu0 0.0
      %567 = vmatprep.subr.mxu0 0.0
      %568 = vmatpush1.msra.mxu0 0.0
      %569 = vmatprep.subr.mxu0 0.0
      %570 = vmatpush1.msra.mxu0 0.0
      %571 = vmatprep.subr.mxu0 0.0
      %572 = vmatpush1.msra.mxu0 0.0
      %573 = vmatprep.subr.mxu0 0.0
      %574 = vmatpush1.msra.mxu0 0.0
      %575 = vmatprep.subr.mxu0 0.0
      %576 = vmatpush1.msra.mxu0 0.0
      %577 = vmatprep.subr.mxu0 0.0
      %578 = vmatpush1.msra.mxu0 0.0
      %579 = vmatprep.subr.mxu0 0.0
      %580 = vmatpush1.msra.mxu0 0.0
      %581 = vmatprep.subr.mxu0 0.0
      %582 = vmatpush1.msra.mxu0 0.0
      %583 = vmatprep.mubr.f32.mxu0 0.0
      %584 = vmatmul.mubr.f32.gmra.mrb[0].mxu0 %v514
      %v585 = vpop.f32.mrb[0].mxu0
      %v586 = vadd.f32 %v510, %v585
      %v587 = vpop.f32.mrb[0].mxu0
      %588 = vmatprep.mubr.f32.mxu0 0.0
      %589 = vmatmul.mubr.f32.gmra.mrb[0].mxu0 %v517
      %v590 = vpop.f32.mrb[0].mxu0
      %v591 = vadd.f32 %v510, %v590
      %v592 = vpop.f32.mrb[0].mxu0
      %593 = vdwg.mxu0
      %v594 = vld [vmem:[%s5] sm:$0xff]
      %v595 = vld [vmem:[%s5 + $0x8] sm:$0xff]
      %v596 = vld [vmem:[%s5 + $0x10] sm:$0xff]
      %v597 = vld [vmem:[%s5 + $0x18] sm:$0xff]
      %v598 = vld [vmem:[%s5 + $0x20] sm:$0xff]
      %v599 = vld [vmem:[%s5 + $0x28] sm:$0xff]
      %v600 = vld [vmem:[%s5 + $0x30] sm:$0xff]
      %v601 = vld [vmem:[%s5 + $0x38] sm:$0xff]
      %vm602 = vcmask 130048
      %v604 = vsel %vm602, %v594, 0
      %v607 = vsel %vm602, %v595, 0
      %v610 = vsel %vm602, %v596, 0
      %v613 = vsel %vm602, %v597, 0
      %v616 = vsel %vm602, %v598, 0
      %v619 = vsel %vm602, %v599, 0
      %v622 = vsel %vm602, %v600, 0
      %v625 = vsel %vm602, %v601, 0
      %627 = vmatprep.subr.mxu0 0.0
      %628 = vmatpush1.msra.mxu0 %v586
      %629 = vmatprep.subr.mxu0 0.0
      %630 = vmatpush1.msra.mxu0 %v591
      %631 = vmatprep.subr.mxu0 0.0
      %632 = vmatpush1.msra.mxu0 0.0
      %633 = vmatprep.subr.mxu0 0.0
      %634 = vmatpush1.msra.mxu0 0.0
      %635 = vmatprep.subr.mxu0 0.0
      %636 = vmatpush1.msra.mxu0 0.0
      %637 = vmatprep.subr.mxu0 0.0
      %638 = vmatpush1.msra.mxu0 0.0
      %639 = vmatprep.subr.mxu0 0.0
      %640 = vmatpush1.msra.mxu0 0.0
      %641 = vmatprep.subr.mxu0 0.0
      %642 = vmatpush1.msra.mxu0 0.0
      %643 = vmatprep.subr.mxu0 0.0
      %644 = vmatpush1.msra.mxu0 0.0
      %645 = vmatprep.subr.mxu0 0.0
      %646 = vmatpush1.msra.mxu0 0.0
      %647 = vmatprep.subr.mxu0 0.0
      %648 = vmatpush1.msra.mxu0 0.0
      %649 = vmatprep.subr.mxu0 0.0
      %650 = vmatpush1.msra.mxu0 0.0
      %651 = vmatprep.subr.mxu0 0.0
      %652 = vmatpush1.msra.mxu0 0.0
      %653 = vmatprep.subr.mxu0 0.0
      %654 = vmatpush1.msra.mxu0 0.0
      %655 = vmatprep.subr.mxu0 0.0
      %656 = vmatpush1.msra.mxu0 0.0
      %657 = vmatprep.subr.mxu0 0.0
      %658 = vmatpush1.msra.mxu0 0.0
      %659 = vmatprep.subr.mxu0 0.0
      %660 = vmatpush1.msra.mxu0 0.0
      %661 = vmatprep.subr.mxu0 0.0
      %662 = vmatpush1.msra.mxu0 0.0
      %663 = vmatprep.subr.mxu0 0.0
      %664 = vmatpush1.msra.mxu0 0.0
      %665 = vmatprep.subr.mxu0 0.0
      %666 = vmatpush1.msra.mxu0 0.0
      %667 = vmatprep.subr.mxu0 0.0
      %668 = vmatpush1.msra.mxu0 0.0
      %669 = vmatprep.subr.mxu0 0.0
      %670 = vmatpush1.msra.mxu0 0.0
      %671 = vmatprep.subr.mxu0 0.0
      %672 = vmatpush1.msra.mxu0 0.0
      %673 = vmatprep.subr.mxu0 0.0
      %674 = vmatpush1.msra.mxu0 0.0
      %675 = vmatprep.subr.mxu0 0.0
      %676 = vmatpush1.msra.mxu0 0.0
      %677 = vmatprep.subr.mxu0 0.0
      %678 = vmatpush1.msra.mxu0 0.0
      %679 = vmatprep.subr.mxu0 0.0
      %680 = vmatpush1.msra.mxu0 0.0
      %681 = vmatprep.subr.mxu0 0.0
      %682 = vmatpush1.msra.mxu0 0.0
      %683 = vmatprep.subr.mxu0 0.0
      %684 = vmatpush1.msra.mxu0 0.0
      %685 = vmatprep.subr.mxu0 0.0
      %686 = vmatpush1.msra.mxu0 0.0
      %687 = vmatprep.subr.mxu0 0.0
      %688 = vmatpush1.msra.mxu0 0.0
      %689 = vmatprep.subr.mxu0 0.0
      %690 = vmatpush1.msra.mxu0 0.0
      %691 = vmatprep.mubr.f32.mxu0 0.0
      %692 = vmatmul.mubr.f32.gmra.mrb[0].mxu0 %v604
      %v693 = vpop.f32.mrb[0].mxu0
      %v694 = vadd.f32 0.0, %v693
      %v695 = vpop.f32.mrb[0].mxu0
      %696 = vmatprep.mubr.f32.mxu0 0.0
      %697 = vmatmul.mubr.f32.gmra.mrb[0].mxu0 %v607
      %v698 = vpop.f32.mrb[0].mxu0
      %v699 = vadd.f32 0.0, %v698
      %v700 = vpop.f32.mrb[0].mxu0
      %701 = vmatprep.mubr.f32.mxu0 0.0
      %702 = vmatmul.mubr.f32.gmra.mrb[0].mxu0 %v610
      %v703 = vpop.f32.mrb[0].mxu0
      %v704 = vadd.f32 0.0, %v703
      %v705 = vpop.f32.mrb[0].mxu0
      %706 = vmatprep.mubr.f32.mxu0 0.0
      %707 = vmatmul.mubr.f32.gmra.mrb[0].mxu0 %v613
      %v708 = vpop.f32.mrb[0].mxu0
      %v709 = vadd.f32 0.0, %v708
      %v710 = vpop.f32.mrb[0].mxu0
      %711 = vmatprep.mubr.f32.mxu0 0.0
      %712 = vmatmul.mubr.f32.gmra.mrb[0].mxu0 %v616
      %v713 = vpop.f32.mrb[0].mxu0
      %v714 = vadd.f32 0.0, %v713
      %v715 = vpop.f32.mrb[0].mxu0
      %716 = vmatprep.mubr.f32.mxu0 0.0
      %717 = vmatmul.mubr.f32.gmra.mrb[0].mxu0 %v619
      %v718 = vpop.f32.mrb[0].mxu0
      %v719 = vadd.f32 0.0, %v718
      %v720 = vpop.f32.mrb[0].mxu0
      %721 = vmatprep.mubr.f32.mxu0 0.0
      %722 = vmatmul.mubr.f32.gmra.mrb[0].mxu0 %v622
      %v723 = vpop.f32.mrb[0].mxu0
      %v724 = vadd.f32 0.0, %v723
      %v725 = vpop.f32.mrb[0].mxu0
      %726 = vmatprep.mubr.f32.mxu0 0.0
      %727 = vmatmul.mubr.f32.gmra.mrb[0].mxu0 %v625
      %v728 = vpop.f32.mrb[0].mxu0
      %v729 = vadd.f32 0.0, %v728
      %v730 = vpop.f32.mrb[0].mxu0
      %731 = vdwg.mxu0
      %v732 = vld [vmem:[%s479] sm:$0xf]
      %v733 = vld [vmem:[%s479 + $0x4] sm:$0xf]
      %v734 = vld [vmem:[%s479 + $0x8] sm:$0xf]
      %v735 = vld [vmem:[%s479 + $0xc] sm:$0xf]
      %v736 = vld [vmem:[%s479 + $0x10] sm:$0xf]
      %v737 = vld [vmem:[%s479 + $0x14] sm:$0xf]
      %v738 = vld [vmem:[%s479 + $0x18] sm:$0xf]
      %v739 = vld [vmem:[%s479 + $0x1c] sm:$0xf]
      %v740 = vld [vmem:[%s6] sm:$0xf]
      %v741 = vld [vmem:[%s6 + $0x4] sm:$0xf]
      %v742 = vld [vmem:[%s6 + $0x8] sm:$0xf]
      %v743 = vld [vmem:[%s6 + $0xc] sm:$0xf]
      %v744 = vld [vmem:[%s6 + $0x10] sm:$0xf]
      %v745 = vld [vmem:[%s6 + $0x14] sm:$0xf]
      %v746 = vld [vmem:[%s6 + $0x18] sm:$0xf]
      %v747 = vld [vmem:[%s6 + $0x1c] sm:$0xf]
      %v748 = vld [vmem:[%s6 + $0x20] sm:$0xf]
      %v749 = vld [vmem:[%s6 + $0x24] sm:$0xf]
      %v750 = vld [vmem:[%s6 + $0x28] sm:$0xf]
      %v751 = vld [vmem:[%s6 + $0x2c] sm:$0xf]
      %v752 = vld [vmem:[%s6 + $0x30] sm:$0xf]
      %v753 = vld [vmem:[%s6 + $0x34] sm:$0xf]
      %v754 = vld [vmem:[%s6 + $0x38] sm:$0xf]
      %v755 = vld [vmem:[%s6 + $0x3c] sm:$0xf]
      %v764 = vunpack.c.l.b16 %v732
      %v765 = vunpack.c.l.b16 %v733
      %v766 = vunpack.c.l.b16 %v734
      %v767 = vunpack.c.l.b16 %v735
      %v768 = vunpack.c.l.b16 %v736
      %v769 = vunpack.c.l.b16 %v737
      %v770 = vunpack.c.l.b16 %v738
      %v771 = vunpack.c.l.b16 %v739
      %v772 = vpack.c.b16 %v765, %v764
      %v773 = vpack.c.b16 %v767, %v766
      %v774 = vpack.c.b16 %v769, %v768
      %v775 = vpack.c.b16 %v771, %v770
      %v796 = vunpack.c.l.b16 %v740
      %v797 = vunpack.c.l.b16 %v741
      %v798 = vunpack.c.l.b16 %v742
      %v799 = vunpack.c.l.b16 %v743
      %v800 = vunpack.c.l.b16 %v744
      %v801 = vunpack.c.l.b16 %v745
      %v802 = vunpack.c.l.b16 %v746
      %v803 = vunpack.c.l.b16 %v747
      %v804 = vunpack.c.l.b16 %v748
      %v805 = vunpack.c.l.b16 %v749
      %v806 = vunpack.c.l.b16 %v750
      %v807 = vunpack.c.l.b16 %v751
      %v808 = vunpack.c.l.b16 %v752
      %v809 = vunpack.c.l.b16 %v753
      %v810 = vunpack.c.l.b16 %v754
      %v811 = vunpack.c.l.b16 %v755
      %v812 = vpack.c.b16 %v797, %v796
      %v813 = vpack.c.b16 %v799, %v798
      %v814 = vpack.c.b16 %v801, %v800
      %v815 = vpack.c.b16 %v803, %v802
      %v816 = vpack.c.b16 %v805, %v804
      %v817 = vpack.c.b16 %v807, %v806
      %v818 = vpack.c.b16 %v809, %v808
      %v819 = vpack.c.b16 %v811, %v810
      %828 = vmatprep.subr.bf16.mxu0 0
      %829 = vmatpush1.bf16.msra.mxu0 %v812
      %830 = vmatprep.subr.bf16.mxu0 0
      %831 = vmatpush1.bf16.msra.mxu0 %v813
      %832 = vmatprep.subr.bf16.mxu0 0
      %833 = vmatpush1.bf16.msra.mxu0 %v814
      %834 = vmatprep.subr.bf16.mxu0 0
      %835 = vmatpush1.bf16.msra.mxu0 %v815
      %836 = vmatprep.subr.bf16.mxu0 0
      %837 = vmatpush1.bf16.msra.mxu0 %v816
      %838 = vmatprep.subr.bf16.mxu0 0
      %839 = vmatpush1.bf16.msra.mxu0 %v817
      %840 = vmatprep.subr.bf16.mxu0 0
      %841 = vmatpush1.bf16.msra.mxu0 %v818
      %842 = vmatprep.subr.bf16.mxu0 0
      %843 = vmatpush1.bf16.msra.mxu0 %v819
      %844 = vmatprep.subr.bf16.mxu0 0
      %845 = vmatpush1.bf16.msra.mxu0 0
      %846 = vmatprep.subr.bf16.mxu0 0
      %847 = vmatpush1.bf16.msra.mxu0 0
      %848 = vmatprep.subr.bf16.mxu0 0
      %849 = vmatpush1.bf16.msra.mxu0 0
      %850 = vmatprep.subr.bf16.mxu0 0
      %851 = vmatpush1.bf16.msra.mxu0 0
      %852 = vmatprep.subr.bf16.mxu0 0
      %853 = vmatpush1.bf16.msra.mxu0 0
      %854 = vmatprep.subr.bf16.mxu0 0
      %855 = vmatpush1.bf16.msra.mxu0 0
      %856 = vmatprep.subr.bf16.mxu0 0
      %857 = vmatpush1.bf16.msra.mxu0 0
      %858 = vmatprep.subr.bf16.mxu0 0
      %859 = vmatpush1.bf16.msra.mxu0 0
      %860 = vmatprep.mubr.bf16.mxu0 0
      %861 = vmatmul.mubr.bf16.gmra.mrb[0].mxu0 %v772
      %v862 = vpop.f32.mrb[0].mxu0
      %v863 = vadd.f32 %v694, %v862
      %v864 = vpop.f32.mrb[0].mxu0
      %v865 = vpop.f32.mrb[0].mxu0
      %v866 = vadd.f32 %v699, %v865
      %v867 = vpop.f32.mrb[0].mxu0
      %868 = vmatprep.mubr.bf16.mxu0 0
      %869 = vmatmul.mubr.bf16.gmra.mrb[0].mxu0 %v773
      %v870 = vpop.f32.mrb[0].mxu0
      %v871 = vadd.f32 %v704, %v870
      %v872 = vpop.f32.mrb[0].mxu0
      %v873 = vpop.f32.mrb[0].mxu0
      %v874 = vadd.f32 %v709, %v873
      %v875 = vpop.f32.mrb[0].mxu0
      %876 = vmatprep.mubr.bf16.mxu0 0
      %877 = vmatmul.mubr.bf16.gmra.mrb[0].mxu0 %v774
      %v878 = vpop.f32.mrb[0].mxu0
      %v879 = vadd.f32 %v714, %v878
      %v880 = vpop.f32.mrb[0].mxu0
      %v881 = vpop.f32.mrb[0].mxu0
      %v882 = vadd.f32 %v719, %v881
      %v883 = vpop.f32.mrb[0].mxu0
      %884 = vmatprep.mubr.bf16.mxu0 0
      %885 = vmatmul.mubr.bf16.gmra.mrb[0].mxu0 %v775
      %v886 = vpop.f32.mrb[0].mxu0
      %v887 = vadd.f32 %v724, %v886
      %v888 = vpop.f32.mrb[0].mxu0
      %v889 = vpop.f32.mrb[0].mxu0
      %v890 = vadd.f32 %v729, %v889
      %v891 = vpop.f32.mrb[0].mxu0
      %892 = vdwg.mxu0
      %v893 = vmax.f32 %v863, 0.0
      %v894 = vmax.f32 %v866, 0.0
      %v895 = vmax.f32 %v871, 0.0
      %v896 = vmax.f32 %v874, 0.0
      %v897 = vmax.f32 %v879, 0.0
      %v898 = vmax.f32 %v882, 0.0
      %v899 = vmax.f32 %v887, 0.0
      %v900 = vmax.f32 %v890, 0.0
      %v901 = vld [vmem:[%s7] sm:$0x1]
      %v903 = vlaneseq
      %v904 = vshrl.u32 %v903, 7
      %v905 = vsub.s32 0, %v904
      %v906 = vrot.slane %v901, %v905
      %v908 = vmul.f32 %v893, %v906
      %v909 = vmul.f32 %v894, %v906
      %v910 = vmul.f32 %v895, %v906
      %v911 = vmul.f32 %v896, %v906
      %v912 = vmul.f32 %v897, %v906
      %v913 = vmul.f32 %v898, %v906
      %v914 = vmul.f32 %v899, %v906
      %v915 = vmul.f32 %v900, %v906
      %v916 = vsel %vm602, %v908, 0.0
      %917 = vadd.xlane.f32.xlu0 %v916
      %v918 = vpop.xlane.xlu0 %917
      %v919 = vsel %vm602, %v909, 0.0
      %920 = vadd.xlane.f32.xlu0 %v919
      %v921 = vpop.xlane.xlu0 %920
      %v922 = vsel %vm602, %v910, 0.0
      %923 = vadd.xlane.f32.xlu0 %v922
      %v924 = vpop.xlane.xlu0 %923
      %v925 = vsel %vm602, %v911, 0.0
      %926 = vadd.xlane.f32.xlu0 %v925
      %v927 = vpop.xlane.xlu0 %926
      %v928 = vsel %vm602, %v912, 0.0
      %929 = vadd.xlane.f32.xlu0 %v928
      %v930 = vpop.xlane.xlu0 %929
      %v931 = vsel %vm602, %v913, 0.0
      %932 = vadd.xlane.f32.xlu0 %v931
      %v933 = vpop.xlane.xlu0 %932
      %v934 = vsel %vm602, %v914, 0.0
      %935 = vadd.xlane.f32.xlu0 %v934
      %v936 = vpop.xlane.xlu0 %935
      %v937 = vsel %vm602, %v915, 0.0
      %938 = vadd.xlane.f32.xlu0 %v937
      %v939 = vpop.xlane.xlu0 %938
      %v940 = vld [vmem:[#allocation2] sm:$0x1]
      %v942 = vlaneseq
      %v943 = vshrl.u32 %v942, 7
      %v944 = vsub.s32 0, %v943
      %v945 = vrot.slane %v940, %v944
      %v947 = vadd.f32 %v918, %v945
      %v948 = vadd.f32 %v921, %v945
      %v949 = vadd.f32 %v924, %v945
      %v950 = vadd.f32 %v927, %v945
      %v951 = vadd.f32 %v930, %v945
      %v952 = vadd.f32 %v933, %v945
      %v953 = vadd.f32 %v936, %v945
      %v954 = vadd.f32 %v939, %v945
      %v955 = vxor.u32 %v947, 2147483648
      %v956 = vxor.u32 %v948, 2147483648
      %v957 = vxor.u32 %v949, 2147483648
      %v958 = vxor.u32 %v950, 2147483648
      %v959 = vxor.u32 %v951, 2147483648
      %v960 = vxor.u32 %v952, 2147483648
      %v961 = vxor.u32 %v953, 2147483648
      %v962 = vxor.u32 %v954, 2147483648
      %v963 = vmul.f32 %v955, 1.442695
      %v964 = vpow.pop %v963
      %v965 = vmul.f32 %v956, 1.442695
      %v966 = vpow.pop %v965
      %v967 = vmul.f32 %v957, 1.442695
      %v968 = vpow.pop %v967
      %v969 = vmul.f32 %v958, 1.442695
      %v970 = vpow.pop %v969
      %v971 = vmul.f32 %v959, 1.442695
      %v972 = vpow.pop %v971
      %v973 = vmul.f32 %v960, 1.442695
      %v974 = vpow.pop %v973
      %v975 = vmul.f32 %v961, 1.442695
      %v976 = vpow.pop %v975
      %v977 = vmul.f32 %v962, 1.442695
      %v978 = vpow.pop %v977
      %v979 = vadd.f32 %v964, 1.0
      %v980 = vadd.f32 %v966, 1.0
      %v981 = vadd.f32 %v968, 1.0
      %v982 = vadd.f32 %v970, 1.0
      %v983 = vadd.f32 %v972, 1.0
      %v984 = vadd.f32 %v974, 1.0
      %v985 = vadd.f32 %v976, 1.0
      %v986 = vadd.f32 %v978, 1.0
      %v987 = vrcp.pop %v979
      %v988 = vmul.f32 1.0, %v987
      %v989 = vrcp.pop %v980
      %v990 = vmul.f32 1.0, %v989
      %v991 = vrcp.pop %v981
      %v992 = vmul.f32 1.0, %v991
      %v993 = vrcp.pop %v982
      %v994 = vmul.f32 1.0, %v993
      %v995 = vrcp.pop %v983
      %v996 = vmul.f32 1.0, %v995
      %v997 = vrcp.pop %v984
      %v998 = vmul.f32 1.0, %v997
      %v999 = vrcp.pop %v985
      %v1000 = vmul.f32 1.0, %v999
      %v1001 = vrcp.pop %v986
      %v1002 = vmul.f32 1.0, %v1001
      %v1003 = vld [vmem:[%s9] sm:$0xff]
      %v1004 = vld [vmem:[%s9 + $0x8] sm:$0xff]
      %v1005 = vld [vmem:[%s9 + $0x10] sm:$0xff]
      %v1006 = vld [vmem:[%s9 + $0x18] sm:$0xff]
      %v1007 = vld [vmem:[%s9 + $0x20] sm:$0xff]
      %v1008 = vld [vmem:[%s9 + $0x28] sm:$0xff]
      %v1009 = vld [vmem:[%s9 + $0x30] sm:$0xff]
      %v1010 = vld [vmem:[%s9 + $0x38] sm:$0xff]
      %v1011 = vld [vmem:[%s9 + $0x40] sm:$0xff]
      %v1012 = vld [vmem:[%s9 + $0x48] sm:$0xff]
      %v1013 = vld [vmem:[%s9 + $0x50] sm:$0xff]
      %v1014 = vld [vmem:[%s9 + $0x58] sm:$0xff]
      %v1015 = vld [vmem:[%s9 + $0x60] sm:$0xff]
      %v1016 = vld [vmem:[%s9 + $0x68] sm:$0xff]
      %v1017 = vld [vmem:[%s9 + $0x70] sm:$0xff]
      %v1018 = vld [vmem:[%s9 + $0x78] sm:$0xff]
      %1020 = vset.pattern.permute.xlu0 0
      %1021 = vperm.xlu0 %1020, %v988
      %v1022 = vpop.permute.xlu0 %1021
      %1025 = vset.pattern.permute.xlu0 0
      %1026 = vperm.xlu0 %1025, %v990
      %v1027 = vpop.permute.xlu0 %1026
      %1030 = vset.pattern.permute.xlu0 0
      %1031 = vperm.xlu0 %1030, %v992
      %v1032 = vpop.permute.xlu0 %1031
      %1035 = vset.pattern.permute.xlu0 0
      %1036 = vperm.xlu0 %1035, %v994
      %v1037 = vpop.permute.xlu0 %1036
      %1040 = vset.pattern.permute.xlu0 0
      %1041 = vperm.xlu0 %1040, %v996
      %v1042 = vpop.permute.xlu0 %1041
      %1045 = vset.pattern.permute.xlu0 0
      %1046 = vperm.xlu0 %1045, %v998
      %v1047 = vpop.permute.xlu0 %1046
      %1050 = vset.pattern.permute.xlu0 0
      %1051 = vperm.xlu0 %1050, %v1000
      %v1052 = vpop.permute.xlu0 %1051
      %1055 = vset.pattern.permute.xlu0 0
      %1056 = vperm.xlu0 %1055, %v1002
      %v1057 = vpop.permute.xlu0 %1056
      %v1059 = vmul.f32 %v1003, %v1022
      %v1060 = vmul.f32 %v1004, %v1022
      %v1061 = vmul.f32 %v1005, %v1027
      %v1062 = vmul.f32 %v1006, %v1027
      %v1063 = vmul.f32 %v1007, %v1032
      %v1064 = vmul.f32 %v1008, %v1032
      %v1065 = vmul.f32 %v1009, %v1037
      %v1066 = vmul.f32 %v1010, %v1037
      %v1067 = vmul.f32 %v1011, %v1042
      %v1068 = vmul.f32 %v1012, %v1042
      %v1069 = vmul.f32 %v1013, %v1047
      %v1070 = vmul.f32 %v1014, %v1047
      %v1071 = vmul.f32 %v1015, %v1052
      %v1072 = vmul.f32 %v1016, %v1052
      %v1073 = vmul.f32 %v1017, %v1057
      %v1074 = vmul.f32 %v1018, %v1057
      %v1075 = vadd.f32 %v1059, %v1061
      %v1076 = vadd.f32 %v1075, %v1063
      %v1077 = vadd.f32 %v1076, %v1065
      %v1078 = vadd.f32 %v1077, %v1067
      %v1079 = vadd.f32 %v1078, %v1069
      %v1080 = vadd.f32 %v1079, %v1071
      %v1081 = vadd.f32 %v1080, %v1073
      %v1082 = vrot.slane %v1081, 4
      %v1083 = vadd.f32 %v1081, %v1082
      %v1084 = vrot.slane %v1083, 2
      %v1085 = vadd.f32 %v1083, %v1084
      %v1086 = vrot.slane %v1085, 1
      %v1087 = vadd.f32 %v1085, %v1086
      %v1088 = vadd.f32 %v1060, %v1062
      %v1089 = vadd.f32 %v1088, %v1064
      %v1090 = vadd.f32 %v1089, %v1066
      %v1091 = vadd.f32 %v1090, %v1068
      %v1092 = vadd.f32 %v1091, %v1070
      %v1093 = vadd.f32 %v1092, %v1072
      %v1094 = vadd.f32 %v1093, %v1074
      %v1095 = vrot.slane %v1094, 4
      %v1096 = vadd.f32 %v1094, %v1095
      %v1097 = vrot.slane %v1096, 2
      %v1098 = vadd.f32 %v1096, %v1097
      %v1099 = vrot.slane %v1098, 1
      %v1100 = vadd.f32 %v1098, %v1099
      %v1101 = vld [vmem:[%s10] sm:$0xf]
      %v1102 = vld [vmem:[%s10 + $0x4] sm:$0xf]
      %v1103 = vld [vmem:[%s10 + $0x8] sm:$0xf]
      %v1104 = vld [vmem:[%s10 + $0xc] sm:$0xf]
      %v1105 = vld [vmem:[%s484] sm:$0xff]
      %v1106 = vld [vmem:[%s484 + $0x8] sm:$0xff]
      %v1107 = vld [vmem:[%s484 + $0x10] sm:$0xff]
      %v1108 = vld [vmem:[%s484 + $0x18] sm:$0xff]
      %v1113 = vunpack.c.l.b16 %v1101
      %v1114 = vunpack.c.l.b16 %v1102
      %v1115 = vunpack.c.l.b16 %v1103
      %v1116 = vunpack.c.l.b16 %v1104
      %v1117 = vpack.c.b16 %v1114, %v1113
      %v1118 = vpack.c.b16 %v1116, %v1115
      %v1123 = vunpack.c.l.b16 %v1105
      %v1124 = vunpack.c.h.b16 %v1105
      %v1125 = vunpack.c.l.b16 %v1106
      %v1126 = vunpack.c.h.b16 %v1106
      %v1127 = vunpack.c.l.b16 %v1107
      %v1128 = vunpack.c.h.b16 %v1107
      %v1129 = vunpack.c.l.b16 %v1108
      %v1130 = vunpack.c.h.b16 %v1108
      %v1131 = vpack.c.b16 %v1125, %v1123
      %v1132 = vpack.c.b16 %v1126, %v1124
      %v1133 = vpack.c.b16 %v1129, %v1127
      %v1134 = vpack.c.b16 %v1130, %v1128
      %vm1139 = vcmask 261120
      %v1141 = vsel %vm1139, %v1117, 0
      %v1144 = vsel %vm1139, %v1118, 0
      %1146 = vmatprep.subr.bf16.mxu0 %v1132
      %1147 = vmatpush1.bf16.msra.mxu0 %v1131
      %1148 = vmatprep.subr.bf16.mxu0 %v1134
      %1149 = vmatpush1.bf16.msra.mxu0 %v1133
      %1150 = vmatprep.subr.bf16.mxu0 0
      %1151 = vmatpush1.bf16.msra.mxu0 0
      %1152 = vmatprep.subr.bf16.mxu0 0
      %1153 = vmatpush1.bf16.msra.mxu0 0
      %1154 = vmatprep.subr.bf16.mxu0 0
      %1155 = vmatpush1.bf16.msra.mxu0 0
      %1156 = vmatprep.subr.bf16.mxu0 0
      %1157 = vmatpush1.bf16.msra.mxu0 0
      %1158 = vmatprep.subr.bf16.mxu0 0
      %1159 = vmatpush1.bf16.msra.mxu0 0
      %1160 = vmatprep.subr.bf16.mxu0 0
      %1161 = vmatpush1.bf16.msra.mxu0 0
      %1162 = vmatprep.subr.bf16.mxu0 0
      %1163 = vmatpush1.bf16.msra.mxu0 0
      %1164 = vmatprep.subr.bf16.mxu0 0
      %1165 = vmatpush1.bf16.msra.mxu0 0
      %1166 = vmatprep.subr.bf16.mxu0 0
      %1167 = vmatpush1.bf16.msra.mxu0 0
      %1168 = vmatprep.subr.bf16.mxu0 0
      %1169 = vmatpush1.bf16.msra.mxu0 0
      %1170 = vmatprep.subr.bf16.mxu0 0
      %1171 = vmatpush1.bf16.msra.mxu0 0
      %1172 = vmatprep.subr.bf16.mxu0 0
      %1173 = vmatpush1.bf16.msra.mxu0 0
      %1174 = vmatprep.subr.bf16.mxu0 0
      %1175 = vmatpush1.bf16.msra.mxu0 0
      %1176 = vmatprep.subr.bf16.mxu0 0
      %1177 = vmatpush1.bf16.msra.mxu0 0
      %1178 = vmatprep.mubr.bf16.mxu0 0
      %1179 = vmatmul.mubr.bf16.gmra.mrb[0].mxu0 %v1141
      %v1180 = vpop.f32.mrb[0].mxu0
      %v1181 = vadd.f32 0.0, %v1180
      %v1182 = vpop.f32.mrb[0].mxu0
      %v1183 = vadd.f32 0.0, %v1182
      %v1184 = vpop.f32.mrb[0].mxu0
      %v1185 = vadd.f32 0.0, %v1184
      %v1186 = vpop.f32.mrb[0].mxu0
      %v1187 = vadd.f32 0.0, %v1186
      %1188 = vmatprep.mubr.bf16.mxu0 0
      %1189 = vmatmul.mubr.bf16.gmra.mrb[0].mxu0 %v1144
      %v1190 = vpop.f32.mrb[0].mxu0
      %v1191 = vadd.f32 0.0, %v1190
      %v1192 = vpop.f32.mrb[0].mxu0
      %v1193 = vadd.f32 0.0, %v1192
      %v1194 = vpop.f32.mrb[0].mxu0
      %v1195 = vadd.f32 0.0, %v1194
      %v1196 = vpop.f32.mrb[0].mxu0
      %v1197 = vadd.f32 0.0, %v1196
      %1198 = vdwg.mxu0
      %v1199 = vmul.f32 %v1181, %v1087
      %v1200 = vmul.f32 %v1183, %v1100
      %v1201 = vmul.f32 %v1185, %v1087
      %v1202 = vmul.f32 %v1187, %v1100
      %v1203 = vmul.f32 %v1191, %v1087
      %v1204 = vmul.f32 %v1193, %v1100
      %v1205 = vmul.f32 %v1195, %v1087
      %v1206 = vmul.f32 %v1197, %v1100
      %v1207 = vld [vmem:[%s11] sm:$0xff]
      %v1208 = vld [vmem:[%s11 + $0x8] sm:$0xff]
      %v1209 = vld [vmem:[%s11 + $0x10] sm:$0xff]
      %v1210 = vld [vmem:[%s11 + $0x18] sm:$0xff]
      %1212 = vset.pattern.permute.xlu0 0
      %1213 = vperm.xlu0 %1212, %v1207
      %v1214 = vpop.permute.xlu0 %1213
      %1217 = vset.pattern.permute.xlu0 0
      %1218 = vperm.xlu0 %1217, %v1208
      %v1219 = vpop.permute.xlu0 %1218
      %1222 = vset.pattern.permute.xlu0 0
      %1223 = vperm.xlu0 %1222, %v1209
      %v1224 = vpop.permute.xlu0 %1223
      %1227 = vset.pattern.permute.xlu0 0
      %1228 = vperm.xlu0 %1227, %v1210
      %v1229 = vpop.permute.xlu0 %1228
      %v1231 = vadd.f32 %v1199, %v1214
      %v1232 = vadd.f32 %v1200, %v1214
      %v1233 = vadd.f32 %v1201, %v1219
      %v1234 = vadd.f32 %v1202, %v1219
      %v1235 = vadd.f32 %v1203, %v1224
      %v1236 = vadd.f32 %v1204, %v1224
      %v1237 = vadd.f32 %v1205, %v1229
      %v1238 = vadd.f32 %v1206, %v1229
      %1239 = vst [vmem:[%s489] sm:$0xff] %v1231
      %1240 = vst [vmem:[%s489 + $0x8] sm:$0xff] %v1232
      %1241 = vst [vmem:[%s489 + $0x10] sm:$0xff] %v1233
      %1242 = vst [vmem:[%s489 + $0x18] sm:$0xff] %v1234
      %1243 = vst [vmem:[%s489 + $0x20] sm:$0xff] %v1235
      %1244 = vst [vmem:[%s489 + $0x28] sm:$0xff] %v1236
      %1245 = vst [vmem:[%s489 + $0x30] sm:$0xff] %v1237
      %1246 = vst [vmem:[%s489 + $0x38] sm:$0xff] %v1238
      %v1249 = vcombine.low %v1087, %v1100
      %v1251 = vunpack.c.l.s4 1966171168
      %v1252 = vunpack.c.0.s8 %v1251
      %v1253 = vlaneseq
      %v1254 = vshrl.u32 %v1253, 7
      %v1255 = vsub.s32 %v1252, %v1254
      %v1256 = vrot.slane %v1249, %v1255
      %v1258 = vunpack.c.l.s4 1966171168
      %v1259 = vunpack.c.0.s8 %v1258
      %v1260 = vlaneseq
      %v1261 = vshrl.u32 %v1260, 7
      %v1262 = vsub.s32 %v1259, %v1261
      %v1263 = vrot.slane %v1256, %v1262
      %v1265 = vlaneseq
      %vm1266 = vcmp.ge.s32.totalorder %v1265, 0
      %vm1267 = vcmp.lt.s32.totalorder %v1265, 256
      %vm1268 = vmand %vm1266, %vm1267
      %1269 = vst.msk [vmem:[%s493] sm:$0x3] %vm1268, %v1263
      %p1270 = scmp.lt.s32.totalorder %s27, 1
      %s1271 = scalar_select %p1270, %s27, 1
      %s1272 = smul.addr %s1271, 8
      %s1273 = smul.addr %s1272, 8
      %s1274 = scalar_lea.vmem %s12, %s1273
      %p1275 = scmp.lt.s32.totalorder %s27, 1
      %s1276 = scalar_select %p1275, %s27, 1
      %s1277 = smul.addr %s1276, 2
      %s1278 = scalar_lea.vmem %s13, %s1277
      // Predicated region
      $region69: #{grid_attention_block_2d.1} parent=67 // pred_check
        %p1279 = pneg %p312
      $region70: #{grid_attention_block_2d.1} parent=67 // pred_check_branch
        %1281 = sbr.rel (%p1279) target = $region72
      $region71: #{grid_attention_block_2d.1} parent=67 // pred_region
        _
      $region72: #{grid_attention_block_2d.1} parent=67 // pred_fallthru
        _
      // Predicated region
      $region73: #{grid_attention_block_2d.1} parent=67 // pred_check
        %p1282 = pneg %p338
      $region74: #{grid_attention_block_2d.1} parent=67 // pred_check_branch
        %1284 = sbr.rel (%p1282) target = $region76
      $region75: #{grid_attention_block_2d.1} parent=67 // pred_region
        _
      $region76: #{grid_attention_block_2d.1} parent=67 // pred_fallthru
        _
    $region68: #{grid_attention_block_2d.1} parent=5 // pred_fallthru
      _
    %p1285 = scmp.le.s32.totalorder 2, %s22
    // Predicated region
    $region77: #{grid_attention_block_2d.1} parent=5 // pred_check
      %p1286 = pneg %p1285
    $region78: #{grid_attention_block_2d.1} parent=5 // pred_check_branch
      %1288 = sbr.rel (%p1286) target = $region80
    $region79: #{grid_attention_block_2d.1} parent=5 // pred_region
      %s1289 = ssub.s32 %s22, 2
      // Predicated region
      $region81: #{grid_attention_block_2d.1} parent=79 // pred_check
        %p1290 = pneg %p318
      $region82: #{grid_attention_block_2d.1} parent=79 // pred_check_branch
        %1292 = sbr.rel (%p1290) target = $region84
      $region83: #{grid_attention_block_2d.1} parent=79 // pred_region
        %p1293 = scmp.lt.s32.totalorder %s28, 1
        %s1294 = scalar_select %p1293, %s28, 1
        %s1295 = smul.addr %s1294, 8
        %s1296 = smul.addr %s1295, 8
        %s1297 = scalar_lea.vmem %s12, %s1296
      $region84: #{grid_attention_block_2d.1} parent=79 // pred_fallthru
        _
      // Predicated region
      $region85: #{grid_attention_block_2d.1} parent=79 // pred_check
        %p1298 = pneg %p344
      $region86: #{grid_attention_block_2d.1} parent=79 // pred_check_branch
        %1300 = sbr.rel (%p1298) target = $region88
      $region87: #{grid_attention_block_2d.1} parent=79 // pred_region
        %p1301 = scmp.lt.s32.totalorder %s28, 1
        %s1302 = scalar_select %p1301, %s28, 1
        %s1303 = smul.addr %s1302, 2
        %s1304 = scalar_lea.vmem %s13, %s1303
      $region88: #{grid_attention_block_2d.1} parent=79 // pred_fallthru
        _
    $region80: #{grid_attention_block_2d.1} parent=5 // pred_fallthru
      _
  $region6: #{grid_attention_block_2d.1} parent=0 // loop_footer
    %s26 = sadd.s32 1, %s22
  $region7: #{grid_attention_block_2d.1} parent=0 // loop_footer_branch
    %21 = sbr.rel target = $region3
  $region8: #{grid_attention_block_2d.1} parent=0 // loop_exit
    _

</llo_original>
